<compile_context>
chip_gen: v5e
topology: v5e:2x2
jax: 0.10.0
libtpu: 0.0.40
codegen_flags: <defaults>
</compile_context>

<pallas_src>
import functools
import math

import jax
import jax.numpy as jnp
from jax.experimental import pallas as pl
from jax.experimental.pallas import tpu as pltpu

# Row alignment 32 keeps streamed blocks legal for f32 (8,128), bf16 (16,128)
# and int8 (32,128) native tilings.
_ROW_ALIGN = 32


def _cdiv(a, b):
    return -(-a // b)


def _as_2d(a):
    if a.ndim == 2:
        return a
    if a.ndim == 1:
        return a.reshape(1, -1)
    return a.reshape(a.shape[0], -1)


def _pick_tile_rows(n_rows, n_cols, streamed_bytes_per_elem, target_block_bytes):
    """Rows per streamed block: ~target bytes per grid step, tiling-legal."""
    per_row = max(1, n_cols * streamed_bytes_per_elem)
    tr = max(1, target_block_bytes // per_row)
    if tr >= n_rows:
        return n_rows                    # full extent: always a legal block dim
    tr = max(_ROW_ALIGN, (tr // _ROW_ALIGN) * _ROW_ALIGN)
    return min(tr, n_rows)


# ---------------------------------------------------------------------------
# Fused kernel.
# ---------------------------------------------------------------------------
def _fused_vae_loss_kernel(
    params_ref,                                        # SMEM f32[6]
    e_x_ref, e_y_ref, f_x_ref, f_y_ref,                # streamed BCE tiles
    nq_mu_ref, nq_std_ref, np_mu_ref, np_std_ref,      # node q / p (resident)
    fq_mu_ref, fq_std_ref, fp_mu_ref, fp_std_ref,      # fea  q / p (resident)
    recon_ref, kl_ref,                                 # (1,1) outputs
    acc_e_ref, acc_f_ref,                              # f32 tile accumulators
    *, steps_e, tile_rows_e, tile_rows_f, rows_e, rows_f, hard_labels,
):
    i = pl.program_id(0)

    @pl.when(i == 0)
    def _init():
        acc_e_ref[...] = jnp.zeros_like(acc_e_ref)
        acc_f_ref[...] = jnp.zeros_like(acc_f_ref)

    def accum_bce(x_ref, y_ref, acc_ref, s, spw, valid_rows):
        x = x_ref[...].astype(jnp.float32)
        y = y_ref[...].astype(jnp.float32)
        # stable softplus(-x): exactly one exp + one log1p per element (EUP)
        sp = jnp.maximum(-x, 0.0) + jnp.log1p(jnp.exp(-jnp.abs(x)))
        if hard_labels:
            # y in {0,1}: scale and pos_weight folded into 2 per-segment scalars.
            contrib = jnp.where(y != 0.0, spw * sp, s * (x + sp))
        else:
            # exact general (soft-target) BCEWithLogits(pos_weight) * scale
            contrib = s * (x + sp) + y * ((spw - s) * sp - s * x)
        # Mask the ragged tail rows of this segment's last block (the OOB part
        # of a partial block holds unspecified data).
        row_ids = jax.lax.broadcasted_iota(jnp.int32, x.shape, 0)
        contrib = jnp.where(row_ids < valid_rows, contrib, 0.0)
        # Tile-shaped accumulation: per-step cost is pure VPU adds; the single
        # cross-lane reduction happens once in the finalize step.
        acc_ref[...] = acc_ref[...] + contrib

    @pl.when(i < steps_e)
    def _edge_step():
        valid = jnp.minimum(rows_e - i * tile_rows_e, tile_rows_e)
        accum_bce(e_x_ref, e_y_ref, acc_e_ref, params_ref[0], params_ref[1], valid)

    @pl.when(i >= steps_e)
    def _fea_step():
        valid = jnp.minimum(rows_f - (i - steps_e) * tile_rows_f, tile_rows_f)
        accum_bce(f_x_ref, f_y_ref, acc_f_ref, params_ref[2], params_ref[3], valid)

    @pl.when(i == pl.num_programs(0) - 1)
    def _finalize():
        def kl_sum(mq_ref, sq_ref, mp_ref, sp_ref):
            mq = mq_ref[...].astype(jnp.float32)
            sq = sq_ref[...].astype(jnp.float32)
            mp = mp_ref[...].astype(jnp.float32)
            s_p = sp_ref[...].astype(jnp.float32)
            inv_sp = pl.reciprocal(s_p, approx=False)   # no per-element divides
            ratio = sq * inv_sp
            var_ratio = ratio * ratio
            d = (mq - mp) * inv_sp
            kl_el = 0.5 * (var_ratio + d * d - 1.0 - jnp.log(var_ratio))
            return jnp.sum(kl_el)

        node_kl = kl_sum(nq_mu_ref, nq_std_ref, np_mu_ref, np_std_ref)
        fea_kl = kl_sum(fq_mu_ref, fq_std_ref, fp_mu_ref, fp_std_ref)

        recon = jnp.sum(acc_e_ref[...]) + jnp.sum(acc_f_ref[...])
        kl_val = params_ref[4] * node_kl + params_ref[5] * fea_kl
        recon_ref[...] = jnp.full((1, 1), recon, dtype=jnp.float32)
        kl_ref[...] = jnp.full((1, 1), kl_val, dtype=jnp.float32)


# ---------------------------------------------------------------------------
# VAEloss.forward equivalent (single pallas_call).
# ---------------------------------------------------------------------------
def vae_loss(alpha, model, adj_orig, fea_orig, edge_pos_weight, fea_pos_weight,
             target_block_bytes=4 * 1024 * 1024, hard_labels=True):
    num_nodes = adj_orig.shape[0]
    # NOTE: reproduces the PyTorch module exactly (it uses adj_orig.shape[1],
    # not fea_orig.shape[1], for the feature-KL weight).
    num_feas = adj_orig.shape[1]

    # ----- BCE operands: free row-major reshapes only (no pad/concat/cast) --
    edge_logits = model["edge_recon"].reshape(adj_orig.shape)
    fea_logits = model["fea_recon"].reshape(fea_orig.shape)
    edge_tgt = adj_orig
    fea_tgt = fea_orig

    ne = edge_tgt.size
    nf = fea_tgt.size
    rows_e, cols_e = edge_logits.shape
    rows_f, cols_f = fea_logits.shape

    be = edge_logits.dtype.itemsize + edge_tgt.dtype.itemsize
    bfea = fea_logits.dtype.itemsize + fea_tgt.dtype.itemsize
    tr_e = _pick_tile_rows(rows_e, cols_e, be, target_block_bytes)
    tr_f = _pick_tile_rows(rows_f, cols_f, bfea, target_block_bytes)
    steps_e = _cdiv(rows_e, tr_e)
    steps_f = _cdiv(rows_f, tr_f)
    num_steps = steps_e + steps_f

    # ----- KL operands: natural (unpadded) 2-D resident blocks --------------
    nq_mu = _as_2d(model["node_q_loc"]); nq_std = _as_2d(model["node_q_scale"])
    np_mu = _as_2d(model["node_p_loc"]); np_std = _as_2d(model["node_p_scale"])
    fq_mu = _as_2d(model["fea_q_loc"]); fq_std = _as_2d(model["fea_q_scale"])
    fp_mu = _as_2d(model["fea_p_loc"]); fp_std = _as_2d(model["fea_p_scale"])
    n_node = nq_mu.size
    n_fea = fq_mu.size

    # ----- per-segment scalars (SMEM f32[6]) ---------------------------------
    alpha_f = jnp.asarray(alpha, jnp.float32)
    epw = jnp.asarray(edge_pos_weight, jnp.float32)
    fpw = jnp.asarray(fea_pos_weight, jnp.float32)
    s_e = alpha_f / ne                       # alpha     * mean over edge elems
    s_f = (1.0 - alpha_f) / nf               # (1-alpha) * mean over fea  elems
    params = jnp.stack([
        s_e, s_e * epw, s_f, s_f * fpw,
        alpha_f * 0.5 / (num_nodes * n_node),
        (1.0 - alpha_f) * 0.5 / (num_feas * n_fea),
    ]).astype(jnp.float32)

    # ----- block specs --------------------------------------------------------
    # Inactive segment's index_map is clamped constant -> its block stays
    # resident and is not re-fetched while the other segment streams.
    edge_idx = lambda i: (jnp.minimum(i, steps_e - 1), 0)
    fea_idx = lambda i: (jnp.maximum(i - steps_e, 0), 0)

    def resident(arr):
        return pl.BlockSpec(arr.shape, lambda i: (0, 0))

    # ----- VMEM budget -> explicit scoped limit (v5e default is only 16 MiB) --
    def nbytes(shape, dt):
        return math.prod(shape) * jnp.dtype(dt).itemsize

    vmem_need = (
        2 * (nbytes((tr_e, cols_e), edge_logits.dtype)
             + nbytes((tr_e, cols_e), edge_tgt.dtype)
             + nbytes((tr_f, cols_f), fea_logits.dtype)
             + nbytes((tr_f, cols_f), fea_tgt.dtype))
        + nbytes((tr_e, cols_e), jnp.float32)
        + nbytes((tr_f, cols_f), jnp.float32)
        + 2 * sum(nbytes(a.shape, a.dtype)
                  for a in (nq_mu, nq_std, np_mu, np_std,
                            fq_mu, fq_std, fp_mu, fp_std))
    )
    vmem_limit = int(min(max(2 * vmem_need, 16 * 1024 * 1024), 96 * 1024 * 1024))

    kernel = functools.partial(
        _fused_vae_loss_kernel,
        steps_e=steps_e, tile_rows_e=tr_e, tile_rows_f=tr_f,
        rows_e=rows_e, rows_f=rows_f, hard_labels=hard_labels)

    recon, kl = pl.pallas_call(
        kernel,
        out_shape=(jax.ShapeDtypeStruct((1, 1), jnp.float32),
                   jax.ShapeDtypeStruct((1, 1), jnp.float32)),
        grid_spec=pltpu.PrefetchScalarGridSpec(
            num_scalar_prefetch=0,
            grid=(num_steps,),
            in_specs=[
                pl.BlockSpec(memory_space=pltpu.MemorySpace.SMEM),  # params
                pl.BlockSpec((tr_e, cols_e), edge_idx),             # edge logits
                pl.BlockSpec((tr_e, cols_e), edge_idx),             # edge targets
                pl.BlockSpec((tr_f, cols_f), fea_idx),              # fea logits
                pl.BlockSpec((tr_f, cols_f), fea_idx),              # fea targets
                resident(nq_mu), resident(nq_std),
                resident(np_mu), resident(np_std),
                resident(fq_mu), resident(fq_std),
                resident(fp_mu), resident(fp_std),
            ],
            out_specs=[pl.BlockSpec((1, 1), lambda i: (0, 0)),
                       pl.BlockSpec((1, 1), lambda i: (0, 0))],
            scratch_shapes=[pltpu.VMEM((tr_e, cols_e), jnp.float32),
                            pltpu.VMEM((tr_f, cols_f), jnp.float32)],
        ),
        compiler_params=pltpu.CompilerParams(
            dimension_semantics=("arbitrary",),
            vmem_limit_bytes=vmem_limit),
    )(params, edge_logits, edge_tgt, fea_logits, fea_tgt,
      nq_mu, nq_std, np_mu, np_std, fq_mu, fq_std, fp_mu, fp_std)

    recon_loss = recon[0, 0]
    kl_loss = kl[0, 0]
    return recon_loss + kl_loss, recon_loss, kl_loss


# ---------------------------------------------------------------------------
# Pure-JAX reference (for correctness check only).
# ---------------------------------------------------------------------------
def _ref_vae_loss(alpha, model, adj_orig, fea_orig, epw, fpw):
    def bce(x, y, pw):
        sp = jnp.maximum(-x, 0.0) + jnp.log1p(jnp.exp(-jnp.abs(x)))
        return jnp.mean((1.0 - y) * x + (1.0 + (pw - 1.0) * y) * sp)

    def kl(mq, sq, mp, sp_):
        vr = (sq / sp_) ** 2
        t1 = ((mq - mp) / sp_) ** 2
        return jnp.mean(0.5 * (vr + t1 - 1.0 - jnp.log(vr)))

    N, Fdim = adj_orig.shape[0], adj_orig.shape[1]
    arl = bce(model["edge_recon"], adj_orig.reshape(-1), epw)
    frl = bce(model["fea_recon"], fea_orig.reshape(-1), fpw)
    recon = alpha * arl + (1 - alpha) * frl
    akl = 0.5 / N * kl(model["node_q_loc"], model["node_q_scale"],
                       model["node_p_loc"], model["node_p_scale"])
    fkl = 0.5 / Fdim * kl(model["fea_q_loc"], model["fea_q_scale"],
                          model["fea_p_loc"], model["fea_p_scale"])
    klv = alpha * akl + (1 - alpha) * fkl
    return recon + klv, recon, klv


if __name__ == "__main__":
    key = jax.random.PRNGKey(0)
    ks = jax.random.split(key, 8)

    N, Fdim, D = 16, 32, 8      # nodes, feature dims, latent dim
    alpha = 0.6

    adj_orig = (jax.random.uniform(ks[0], (N, N)) > 0.7).astype(jnp.float32)
    fea_orig = (jax.random.uniform(ks[1], (N, Fdim)) > 0.5).astype(jnp.float32)

    model = {
        # flat reconstruction logits (model.edge_recon / model.fea_recon)
        "edge_recon": jax.random.normal(ks[2], (N * N,), jnp.float32),
        "fea_recon": jax.random.normal(ks[3], (N * Fdim,), jnp.float32),
        # node posterior q(z) and standard-normal prior p(z)
        "node_q_loc": jax.random.normal(ks[4], (N, D), jnp.float32),
        "node_q_scale": jnp.exp(0.1 * jax.random.normal(ks[5], (N, D), jnp.float32)),
        "node_p_loc": jnp.zeros((N, D), jnp.float32),
        "node_p_scale": jnp.ones((N, D), jnp.float32),
        # feature posterior / prior
        "fea_q_loc": jax.random.normal(ks[6], (Fdim, D), jnp.float32),
        "fea_q_scale": jnp.exp(0.1 * jax.random.normal(ks[7], (Fdim, D), jnp.float32)),
        "fea_p_loc": jnp.zeros((Fdim, D), jnp.float32),
        "fea_p_scale": jnp.ones((Fdim, D), jnp.float32),
    }

    edge_pos_weight = jnp.float32(3.0)
    fea_pos_weight = jnp.float32(1.5)

    vae_loss_jit = jax.jit(vae_loss,
                           static_argnames=("target_block_bytes", "hard_labels"))

    loss, recon_loss, kl = vae_loss_jit(alpha, model, adj_orig, fea_orig,
                                        edge_pos_weight, fea_pos_weight)
    loss = jax.block_until_ready(loss)
    recon_loss = jax.block_until_ready(recon_loss)
    kl = jax.block_until_ready(kl)

    rloss, rrecon, rkl = _ref_vae_loss(alpha, model, adj_orig, fea_orig,
                                       edge_pos_weight, fea_pos_weight)
    assert jnp.allclose(loss, rloss, rtol=1e-5, atol=1e-5)
    assert jnp.allclose(recon_loss, rrecon, rtol=1e-5, atol=1e-5)
    assert jnp.allclose(kl, rkl, rtol=1e-5, atol=1e-5)

    print("KERNEL_OK")
</pallas_src>

<mosaic_0001>
module attributes {stable_mosaic.version = 11 : i64} {
  func.func @_fused_vae_loss_kernel(%arg0: i32, %arg1: memref<6xf32, #tpu.memory_space<smem>>, %arg2: memref<16x16xf32, #tpu.memory_space<vmem>>, %arg3: memref<16x16xf32, #tpu.memory_space<vmem>>, %arg4: memref<16x32xf32, #tpu.memory_space<vmem>>, %arg5: memref<16x32xf32, #tpu.memory_space<vmem>>, %arg6: memref<16x8xf32, #tpu.memory_space<vmem>>, %arg7: memref<16x8xf32, #tpu.memory_space<vmem>>, %arg8: memref<16x8xf32, #tpu.memory_space<vmem>>, %arg9: memref<16x8xf32, #tpu.memory_space<vmem>>, %arg10: memref<32x8xf32, #tpu.memory_space<vmem>>, %arg11: memref<32x8xf32, #tpu.memory_space<vmem>>, %arg12: memref<32x8xf32, #tpu.memory_space<vmem>>, %arg13: memref<32x8xf32, #tpu.memory_space<vmem>>, %arg14: memref<1x1xf32, #tpu.memory_space<vmem>>, %arg15: memref<1x1xf32, #tpu.memory_space<vmem>>, %arg16: memref<16x16xf32, #tpu.memory_space<vmem>>, %arg17: memref<16x32xf32, #tpu.memory_space<vmem>>) attributes {dimension_semantics = [#tpu.dimension_semantics<arbitrary>], iteration_bounds = array<i64: 2>, scalar_prefetch = 0 : i64, scratch_operands = 2 : i64, tpu.core_type = #tpu.core_type<tc>, window_params = [{transform_indices = @transform_0, window_bounds = array<i64: 6>}, {transform_indices = @transform_1, window_bounds = array<i64: 16, 16>}, {transform_indices = @transform_2, window_bounds = array<i64: 16, 16>}, {transform_indices = @transform_3, window_bounds = array<i64: 16, 32>}, {transform_indices = @transform_4, window_bounds = array<i64: 16, 32>}, {pipeline_mode = #tpu.pipeline_mode<synchronous>, transform_indices = @transform_5, window_bounds = array<i64: 16, 8>}, {pipeline_mode = #tpu.pipeline_mode<synchronous>, transform_indices = @transform_6, window_bounds = array<i64: 16, 8>}, {pipeline_mode = #tpu.pipeline_mode<synchronous>, transform_indices = @transform_7, window_bounds = array<i64: 16, 8>}, {pipeline_mode = #tpu.pipeline_mode<synchronous>, transform_indices = @transform_8, window_bounds = array<i64: 16, 8>}, {pipeline_mode = #tpu.pipeline_mode<synchronous>, transform_indices = @transform_9, window_bounds = array<i64: 32, 8>}, {pipeline_mode = #tpu.pipeline_mode<synchronous>, transform_indices = @transform_10, window_bounds = array<i64: 32, 8>}, {pipeline_mode = #tpu.pipeline_mode<synchronous>, transform_indices = @transform_11, window_bounds = array<i64: 32, 8>}, {pipeline_mode = #tpu.pipeline_mode<synchronous>, transform_indices = @transform_12, window_bounds = array<i64: 32, 8>}, {pipeline_mode = #tpu.pipeline_mode<synchronous>, transform_indices = @transform_13, window_bounds = array<i64: 1, 1>}, {pipeline_mode = #tpu.pipeline_mode<synchronous>, transform_indices = @transform_14, window_bounds = array<i64: 1, 1>}]} {
    %c0_i32 = arith.constant 0 : i32
    %0 = arith.cmpi eq, %arg0, %c0_i32 : i32
    %1 = arith.extui %0 : i1 to i32
    %c0_i32_0 = arith.constant 0 : i32
    %2 = arith.cmpi ne, %1, %c0_i32_0 : i32
    scf.if %2 {
      %cst = arith.constant 0.000000e+00 : f32
      %12 = vector.broadcast %cst : f32 to vector<16x16xf32>
      %c0 = arith.constant 0 : index
      %c0_6 = arith.constant 0 : index
      %13 = vector.load %arg16[%c0, %c0_6] : memref<16x16xf32, #tpu.memory_space<vmem>>, vector<16x16xf32>
      tpu.vector_store %arg16[%c0, %c0_6], %12 {strides = array<i32>} : memref<16x16xf32, #tpu.memory_space<vmem>>, vector<16x16xf32>,
      %cst_7 = arith.constant 0.000000e+00 : f32
      %14 = vector.broadcast %cst_7 : f32 to vector<16x32xf32>
      %c0_8 = arith.constant 0 : index
      %c0_9 = arith.constant 0 : index
      %15 = vector.load %arg17[%c0_8, %c0_9] : memref<16x32xf32, #tpu.memory_space<vmem>>, vector<16x32xf32>
      tpu.vector_store %arg17[%c0_8, %c0_9], %14 {strides = array<i32>} : memref<16x32xf32, #tpu.memory_space<vmem>>, vector<16x32xf32>,
    } else {
    }
    %c1_i32 = arith.constant 1 : i32
    %3 = arith.cmpi slt, %arg0, %c1_i32 : i32
    %4 = arith.extui %3 : i1 to i32
    %c0_i32_1 = arith.constant 0 : i32
    %5 = arith.cmpi ne, %4, %c0_i32_1 : i32
    scf.if %5 {
      %c16_i32 = arith.constant 16 : i32
      %12 = arith.muli %arg0, %c16_i32 : i32
      %c16_i32_6 = arith.constant 16 : i32
      %13 = arith.subi %c16_i32_6, %12 : i32
      %c16_i32_7 = arith.constant 16 : i32
      %14 = arith.minsi %13, %c16_i32_7 : i32
      %c0 = arith.constant 0 : index
      %15 = memref.load %arg1[%c0] : memref<6xf32, #tpu.memory_space<smem>>
      %c1 = arith.constant 1 : index
      %16 = memref.load %arg1[%c1] : memref<6xf32, #tpu.memory_space<smem>>
      %c0_8 = arith.constant 0 : index
      %c0_9 = arith.constant 0 : index
      %17 = vector.load %arg2[%c0_8, %c0_9] : memref<16x16xf32, #tpu.memory_space<vmem>>, vector<16x16xf32>
      %c0_10 = arith.constant 0 : index
      %c0_11 = arith.constant 0 : index
      %18 = vector.load %arg3[%c0_10, %c0_11] : memref<16x16xf32, #tpu.memory_space<vmem>>, vector<16x16xf32>
      %cst = arith.constant 0.000000e+00 : f32
      %19 = vector.broadcast %cst : f32 to vector<16x16xf32>
      %20 = arith.subf %19, %17 : vector<16x16xf32>
      %cst_12 = arith.constant 0.000000e+00 : f32
      %21 = vector.broadcast %cst_12 : f32 to vector<16x16xf32>
      %22 = arith.maximumf %20, %21 : vector<16x16xf32>
      %23 = math.absf %17 : vector<16x16xf32>
      %cst_13 = arith.constant 0.000000e+00 : f32
      %24 = vector.broadcast %cst_13 : f32 to vector<16x16xf32>
      %25 = arith.subf %24, %23 : vector<16x16xf32>
      %26 = math.exp %25 : vector<16x16xf32>
      %27 = math.log1p %26 : vector<16x16xf32>
      %28 = arith.addf %22, %27 : vector<16x16xf32>
      %cst_14 = arith.constant 0.000000e+00 : f32
      %29 = vector.broadcast %cst_14 : f32 to vector<16x16xf32>
      %30 = arith.cmpf one, %18, %29 : vector<16x16xf32>
      %31 = vector.broadcast %16 : f32 to vector<16x16xf32>
      %32 = arith.mulf %31, %28 : vector<16x16xf32>
      %33 = arith.addf %17, %28 : vector<16x16xf32>
      %34 = vector.broadcast %15 : f32 to vector<16x16xf32>
      %35 = arith.mulf %34, %33 : vector<16x16xf32>
      %36 = arith.select %30, %32, %35 : vector<16x16xi1>, vector<16x16xf32>
      %37 = tpu.iota {dimensions = array<i32: 0>} : vector<16x16xi32>
      %38 = vector.broadcast %14 : i32 to vector<16x16xi32>
      %39 = arith.cmpi slt, %37, %38 : vector<16x16xi32>
      %cst_15 = arith.constant 0.000000e+00 : f32
      %40 = vector.broadcast %cst_15 : f32 to vector<16x16xf32>
      %41 = arith.select %39, %36, %40 : vector<16x16xi1>, vector<16x16xf32>
      %c0_16 = arith.constant 0 : index
      %c0_17 = arith.constant 0 : index
      %42 = vector.load %arg16[%c0_16, %c0_17] : memref<16x16xf32, #tpu.memory_space<vmem>>, vector<16x16xf32>
      %43 = arith.addf %42, %41 : vector<16x16xf32>
      %c0_18 = arith.constant 0 : index
      %c0_19 = arith.constant 0 : index
      %44 = vector.load %arg16[%c0_18, %c0_19] : memref<16x16xf32, #tpu.memory_space<vmem>>, vector<16x16xf32>
      tpu.vector_store %arg16[%c0_18, %c0_19], %43 {strides = array<i32>} : memref<16x16xf32, #tpu.memory_space<vmem>>, vector<16x16xf32>,
    } else {
    }
    %c1_i32_2 = arith.constant 1 : i32
    %6 = arith.cmpi sge, %arg0, %c1_i32_2 : i32
    %7 = arith.extui %6 : i1 to i32
    %c0_i32_3 = arith.constant 0 : i32
    %8 = arith.cmpi ne, %7, %c0_i32_3 : i32
    scf.if %8 {
      %c1_i32_6 = arith.constant 1 : i32
      %12 = arith.subi %arg0, %c1_i32_6 : i32
      %c16_i32 = arith.constant 16 : i32
      %13 = arith.muli %12, %c16_i32 : i32
      %c16_i32_7 = arith.constant 16 : i32
      %14 = arith.subi %c16_i32_7, %13 : i32
      %c16_i32_8 = arith.constant 16 : i32
      %15 = arith.minsi %14, %c16_i32_8 : i32
      %c2 = arith.constant 2 : index
      %16 = memref.load %arg1[%c2] : memref<6xf32, #tpu.memory_space<smem>>
      %c3 = arith.constant 3 : index
      %17 = memref.load %arg1[%c3] : memref<6xf32, #tpu.memory_space<smem>>
      %c0 = arith.constant 0 : index
      %c0_9 = arith.constant 0 : index
      %18 = vector.load %arg4[%c0, %c0_9] : memref<16x32xf32, #tpu.memory_space<vmem>>, vector<16x32xf32>
      %c0_10 = arith.constant 0 : index
      %c0_11 = arith.constant 0 : index
      %19 = vector.load %arg5[%c0_10, %c0_11] : memref<16x32xf32, #tpu.memory_space<vmem>>, vector<16x32xf32>
      %cst = arith.constant 0.000000e+00 : f32
      %20 = vector.broadcast %cst : f32 to vector<16x32xf32>
      %21 = arith.subf %20, %18 : vector<16x32xf32>
      %cst_12 = arith.constant 0.000000e+00 : f32
      %22 = vector.broadcast %cst_12 : f32 to vector<16x32xf32>
      %23 = arith.maximumf %21, %22 : vector<16x32xf32>
      %24 = math.absf %18 : vector<16x32xf32>
      %cst_13 = arith.constant 0.000000e+00 : f32
      %25 = vector.broadcast %cst_13 : f32 to vector<16x32xf32>
      %26 = arith.subf %25, %24 : vector<16x32xf32>
      %27 = math.exp %26 : vector<16x32xf32>
      %28 = math.log1p %27 : vector<16x32xf32>
      %29 = arith.addf %23, %28 : vector<16x32xf32>
      %cst_14 = arith.constant 0.000000e+00 : f32
      %30 = vector.broadcast %cst_14 : f32 to vector<16x32xf32>
      %31 = arith.cmpf one, %19, %30 : vector<16x32xf32>
      %32 = vector.broadcast %17 : f32 to vector<16x32xf32>
      %33 = arith.mulf %32, %29 : vector<16x32xf32>
      %34 = arith.addf %18, %29 : vector<16x32xf32>
      %35 = vector.broadcast %16 : f32 to vector<16x32xf32>
      %36 = arith.mulf %35, %34 : vector<16x32xf32>
      %37 = arith.select %31, %33, %36 : vector<16x32xi1>, vector<16x32xf32>
      %38 = tpu.iota {dimensions = array<i32: 0>} : vector<16x32xi32>
      %39 = vector.broadcast %15 : i32 to vector<16x32xi32>
      %40 = arith.cmpi slt, %38, %39 : vector<16x32xi32>
      %cst_15 = arith.constant 0.000000e+00 : f32
      %41 = vector.broadcast %cst_15 : f32 to vector<16x32xf32>
      %42 = arith.select %40, %37, %41 : vector<16x32xi1>, vector<16x32xf32>
      %c0_16 = arith.constant 0 : index
      %c0_17 = arith.constant 0 : index
      %43 = vector.load %arg17[%c0_16, %c0_17] : memref<16x32xf32, #tpu.memory_space<vmem>>, vector<16x32xf32>
      %44 = arith.addf %43, %42 : vector<16x32xf32>
      %c0_18 = arith.constant 0 : index
      %c0_19 = arith.constant 0 : index
      %45 = vector.load %arg17[%c0_18, %c0_19] : memref<16x32xf32, #tpu.memory_space<vmem>>, vector<16x32xf32>
      tpu.vector_store %arg17[%c0_18, %c0_19], %44 {strides = array<i32>} : memref<16x32xf32, #tpu.memory_space<vmem>>, vector<16x32xf32>,
    } else {
    }
    %c1_i32_4 = arith.constant 1 : i32
    %9 = arith.cmpi eq, %arg0, %c1_i32_4 : i32
    %10 = arith.extui %9 : i1 to i32
    %c0_i32_5 = arith.constant 0 : i32
    %11 = arith.cmpi ne, %10, %c0_i32_5 : i32
    scf.if %11 {
      %c0 = arith.constant 0 : index
      %c0_6 = arith.constant 0 : index
      %12 = vector.load %arg6[%c0, %c0_6] : memref<16x8xf32, #tpu.memory_space<vmem>>, vector<16x8xf32>
      %c0_7 = arith.constant 0 : index
      %c0_8 = arith.constant 0 : index
      %13 = vector.load %arg7[%c0_7, %c0_8] : memref<16x8xf32, #tpu.memory_space<vmem>>, vector<16x8xf32>
      %c0_9 = arith.constant 0 : index
      %c0_10 = arith.constant 0 : index
      %14 = vector.load %arg8[%c0_9, %c0_10] : memref<16x8xf32, #tpu.memory_space<vmem>>, vector<16x8xf32>
      %c0_11 = arith.constant 0 : index
      %c0_12 = arith.constant 0 : index
      %15 = vector.load %arg9[%c0_11, %c0_12] : memref<16x8xf32, #tpu.memory_space<vmem>>, vector<16x8xf32>
      %16 = tpu.reciprocal %15 : vector<16x8xf32> -> vector<16x8xf32>
      %17 = arith.mulf %13, %16 : vector<16x8xf32>
      %18 = arith.mulf %17, %17 : vector<16x8xf32>
      %19 = arith.subf %12, %14 : vector<16x8xf32>
      %20 = arith.mulf %19, %16 : vector<16x8xf32>
      %21 = arith.mulf %20, %20 : vector<16x8xf32>
      %22 = arith.addf %18, %21 : vector<16x8xf32>
      %cst = arith.constant 1.000000e+00 : f32
      %23 = vector.broadcast %cst : f32 to vector<16x8xf32>
      %24 = arith.subf %22, %23 : vector<16x8xf32>
      %25 = math.log %18 : vector<16x8xf32>
      %26 = arith.subf %24, %25 : vector<16x8xf32>
      %cst_13 = arith.constant 5.000000e-01 : f32
      %27 = vector.broadcast %cst_13 : f32 to vector<16x8xf32>
      %28 = arith.mulf %27, %26 : vector<16x8xf32>
      %29 = vector.shape_cast %28 : vector<16x8xf32> to vector<1x16x8xf32>
      %cst_14 = arith.constant dense<0.000000e+00> : vector<1xf32>
      %30 = vector.multi_reduction <add>, %29, %cst_14 [1, 2] : vector<1x16x8xf32> to vector<1xf32>
      %31 = vector.shape_cast %30 : vector<1xf32> to vector<1x1x1xf32>
      %32 = vector.extract %31[0, 0, 0] : f32 from vector<1x1x1xf32>
      %c0_15 = arith.constant 0 : index
      %c0_16 = arith.constant 0 : index
      %33 = vector.load %arg10[%c0_15, %c0_16] : memref<32x8xf32, #tpu.memory_space<vmem>>, vector<32x8xf32>
      %c0_17 = arith.constant 0 : index
      %c0_18 = arith.constant 0 : index
      %34 = vector.load %arg11[%c0_17, %c0_18] : memref<32x8xf32, #tpu.memory_space<vmem>>, vector<32x8xf32>
      %c0_19 = arith.constant 0 : index
      %c0_20 = arith.constant 0 : index
      %35 = vector.load %arg12[%c0_19, %c0_20] : memref<32x8xf32, #tpu.memory_space<vmem>>, vector<32x8xf32>
      %c0_21 = arith.constant 0 : index
      %c0_22 = arith.constant 0 : index
      %36 = vector.load %arg13[%c0_21, %c0_22] : memref<32x8xf32, #tpu.memory_space<vmem>>, vector<32x8xf32>
      %37 = tpu.reciprocal %36 : vector<32x8xf32> -> vector<32x8xf32>
      %38 = arith.mulf %34, %37 : vector<32x8xf32>
      %39 = arith.mulf %38, %38 : vector<32x8xf32>
      %40 = arith.subf %33, %35 : vector<32x8xf32>
      %41 = arith.mulf %40, %37 : vector<32x8xf32>
      %42 = arith.mulf %41, %41 : vector<32x8xf32>
      %43 = arith.addf %39, %42 : vector<32x8xf32>
      %cst_23 = arith.constant 1.000000e+00 : f32
      %44 = vector.broadcast %cst_23 : f32 to vector<32x8xf32>
      %45 = arith.subf %43, %44 : vector<32x8xf32>
      %46 = math.log %39 : vector<32x8xf32>
      %47 = arith.subf %45, %46 : vector<32x8xf32>
      %cst_24 = arith.constant 5.000000e-01 : f32
      %48 = vector.broadcast %cst_24 : f32 to vector<32x8xf32>
      %49 = arith.mulf %48, %47 : vector<32x8xf32>
      %50 = vector.shape_cast %49 : vector<32x8xf32> to vector<1x32x8xf32>
      %cst_25 = arith.constant dense<0.000000e+00> : vector<1xf32>
      %51 = vector.multi_reduction <add>, %50, %cst_25 [1, 2] : vector<1x32x8xf32> to vector<1xf32>
      %52 = vector.shape_cast %51 : vector<1xf32> to vector<1x1x1xf32>
      %53 = vector.extract %52[0, 0, 0] : f32 from vector<1x1x1xf32>
      %c0_26 = arith.constant 0 : index
      %c0_27 = arith.constant 0 : index
      %54 = vector.load %arg16[%c0_26, %c0_27] : memref<16x16xf32, #tpu.memory_space<vmem>>, vector<16x16xf32>
      %55 = vector.shape_cast %54 : vector<16x16xf32> to vector<1x16x16xf32>
      %cst_28 = arith.constant dense<0.000000e+00> : vector<1xf32>
      %56 = vector.multi_reduction <add>, %55, %cst_28 [1, 2] : vector<1x16x16xf32> to vector<1xf32>
      %57 = vector.shape_cast %56 : vector<1xf32> to vector<1x1x1xf32>
      %58 = vector.extract %57[0, 0, 0] : f32 from vector<1x1x1xf32>
      %c0_29 = arith.constant 0 : index
      %c0_30 = arith.constant 0 : index
      %59 = vector.load %arg17[%c0_29, %c0_30] : memref<16x32xf32, #tpu.memory_space<vmem>>, vector<16x32xf32>
      %60 = vector.shape_cast %59 : vector<16x32xf32> to vector<1x16x32xf32>
      %cst_31 = arith.constant dense<0.000000e+00> : vector<1xf32>
      %61 = vector.multi_reduction <add>, %60, %cst_31 [1, 2] : vector<1x16x32xf32> to vector<1xf32>
      %62 = vector.shape_cast %61 : vector<1xf32> to vector<1x1x1xf32>
      %63 = vector.extract %62[0, 0, 0] : f32 from vector<1x1x1xf32>
      %64 = arith.addf %58, %63 : f32
      %c4 = arith.constant 4 : index
      %65 = memref.load %arg1[%c4] : memref<6xf32, #tpu.memory_space<smem>>
      %66 = arith.mulf %65, %32 : f32
      %c5 = arith.constant 5 : index
      %67 = memref.load %arg1[%c5] : memref<6xf32, #tpu.memory_space<smem>>
      %68 = arith.mulf %67, %53 : f32
      %69 = arith.addf %66, %68 : f32
      %70 = vector.broadcast %64 : f32 to vector<1x1xf32>
      %c0_32 = arith.constant 0 : index
      %c0_33 = arith.constant 0 : index
      %71 = vector.load %arg14[%c0_32, %c0_33] : memref<1x1xf32, #tpu.memory_space<vmem>>, vector<1x1xf32>
      tpu.vector_store %arg14[%c0_32, %c0_33], %70 {strides = array<i32>} : memref<1x1xf32, #tpu.memory_space<vmem>>, vector<1x1xf32>,
      %72 = vector.broadcast %69 : f32 to vector<1x1xf32>
      %c0_34 = arith.constant 0 : index
      %c0_35 = arith.constant 0 : index
      %73 = vector.load %arg15[%c0_34, %c0_35] : memref<1x1xf32, #tpu.memory_space<vmem>>, vector<1x1xf32>
      tpu.vector_store %arg15[%c0_34, %c0_35], %72 {strides = array<i32>} : memref<1x1xf32, #tpu.memory_space<vmem>>, vector<1x1xf32>,
    } else {
    }
    return
  }
  func.func @transform_0(%arg0: i32) -> i32 {
    %c0_i32 = arith.constant 0 : i32
    %c0_i32_0 = arith.constant 0 : i32
    return %c0_i32 : i32
  }
  func.func @transform_1(%arg0: i32) -> (i32, i32) {
    %c0_i32 = arith.constant 0 : i32
    %0 = arith.minsi %arg0, %c0_i32 : i32
    %c0_i32_0 = arith.constant 0 : i32
    %c0_i32_1 = arith.constant 0 : i32
    return %0, %c0_i32_0 : i32, i32
  }
  func.func @transform_2(%arg0: i32) -> (i32, i32) {
    %c0_i32 = arith.constant 0 : i32
    %0 = arith.minsi %arg0, %c0_i32 : i32
    %c0_i32_0 = arith.constant 0 : i32
    %c0_i32_1 = arith.constant 0 : i32
    return %0, %c0_i32_0 : i32, i32
  }
  func.func @transform_3(%arg0: i32) -> (i32, i32) {
    %c1_i32 = arith.constant 1 : i32
    %0 = arith.subi %arg0, %c1_i32 : i32
    %c0_i32 = arith.constant 0 : i32
    %1 = arith.maxsi %0, %c0_i32 : i32
    %c0_i32_0 = arith.constant 0 : i32
    %c0_i32_1 = arith.constant 0 : i32
    return %1, %c0_i32_0 : i32, i32
  }
  func.func @transform_4(%arg0: i32) -> (i32, i32) {
    %c1_i32 = arith.constant 1 : i32
    %0 = arith.subi %arg0, %c1_i32 : i32
    %c0_i32 = arith.constant 0 : i32
    %1 = arith.maxsi %0, %c0_i32 : i32
    %c0_i32_0 = arith.constant 0 : i32
    %c0_i32_1 = arith.constant 0 : i32
    return %1, %c0_i32_0 : i32, i32
  }
  func.func @transform_5(%arg0: i32) -> (i32, i32) {
    %c0_i32 = arith.constant 0 : i32
    %c0_i32_0 = arith.constant 0 : i32
    %c0_i32_1 = arith.constant 0 : i32
    return %c0_i32, %c0_i32_0 : i32, i32
  }
  func.func @transform_6(%arg0: i32) -> (i32, i32) {
    %c0_i32 = arith.constant 0 : i32
    %c0_i32_0 = arith.constant 0 : i32
    %c0_i32_1 = arith.constant 0 : i32
    return %c0_i32, %c0_i32_0 : i32, i32
  }
  func.func @transform_7(%arg0: i32) -> (i32, i32) {
    %c0_i32 = arith.constant 0 : i32
    %c0_i32_0 = arith.constant 0 : i32
    %c0_i32_1 = arith.constant 0 : i32
    return %c0_i32, %c0_i32_0 : i32, i32
  }
  func.func @transform_8(%arg0: i32) -> (i32, i32) {
    %c0_i32 = arith.constant 0 : i32
    %c0_i32_0 = arith.constant 0 : i32
    %c0_i32_1 = arith.constant 0 : i32
    return %c0_i32, %c0_i32_0 : i32, i32
  }
  func.func @transform_9(%arg0: i32) -> (i32, i32) {
    %c0_i32 = arith.constant 0 : i32
    %c0_i32_0 = arith.constant 0 : i32
    %c0_i32_1 = arith.constant 0 : i32
    return %c0_i32, %c0_i32_0 : i32, i32
  }
  func.func @transform_10(%arg0: i32) -> (i32, i32) {
    %c0_i32 = arith.constant 0 : i32
    %c0_i32_0 = arith.constant 0 : i32
    %c0_i32_1 = arith.constant 0 : i32
    return %c0_i32, %c0_i32_0 : i32, i32
  }
  func.func @transform_11(%arg0: i32) -> (i32, i32) {
    %c0_i32 = arith.constant 0 : i32
    %c0_i32_0 = arith.constant 0 : i32
    %c0_i32_1 = arith.constant 0 : i32
    return %c0_i32, %c0_i32_0 : i32, i32
  }
  func.func @transform_12(%arg0: i32) -> (i32, i32) {
    %c0_i32 = arith.constant 0 : i32
    %c0_i32_0 = arith.constant 0 : i32
    %c0_i32_1 = arith.constant 0 : i32
    return %c0_i32, %c0_i32_0 : i32, i32
  }
  func.func @transform_13(%arg0: i32) -> (i32, i32) {
    %c0_i32 = arith.constant 0 : i32
    %c0_i32_0 = arith.constant 0 : i32
    %c0_i32_1 = arith.constant 0 : i32
    return %c0_i32, %c0_i32_0 : i32, i32
  }
  func.func @transform_14(%arg0: i32) -> (i32, i32) {
    %c0_i32 = arith.constant 0 : i32
    %c0_i32_0 = arith.constant 0 : i32
    %c0_i32_1 = arith.constant 0 : i32
    return %c0_i32, %c0_i32_0 : i32, i32
  }
}

</mosaic_0001>

<llo_original>
// kernel: vae_loss.1
$region0: #{vae_loss.1}
  #allocation0 [shape = 'u32[]', space=smem, size = 0x4, offset = 0x4, fixed_abs, tag = 'smem constant byte address 0x4 - core index']
  #allocation1 [shape = 'u32[72,128]{1,0:T(1,128)}', space=vmem, size = 0x9000, scoped, tag = 'internal scratch']
  #allocation2 [shape = 'f32[16,16]{1,0:T(8,128)}', space=vmem, size = 0x2000, scoped, tag = 'scratch operand']
  #allocation3 [shape = 'f32[16,32]{1,0:T(8,128)}', space=vmem, size = 0x2000, scoped, tag = 'scratch operand']
  %s0 = inlined_call_operand.vmem [shape: f32[6], index: 0, kind: input, shape index: {}]
  %s1 = inlined_call_operand.vmem [shape: f32[16,16], index: 1, kind: input, shape index: {}]
  %s2 = inlined_call_operand.vmem [shape: f32[16,16], index: 2, kind: input, shape index: {}]
  %s3 = inlined_call_operand.vmem [shape: f32[16,32], index: 3, kind: input, shape index: {}]
  %s4 = inlined_call_operand.vmem [shape: f32[16,32], index: 4, kind: input, shape index: {}]
  %s5 = inlined_call_operand.vmem [shape: f32[16,8], index: 5, kind: input, shape index: {}]
  %s6 = inlined_call_operand.vmem [shape: f32[16,8], index: 6, kind: input, shape index: {}]
  %s7 = inlined_call_operand.vmem [shape: f32[16,8], index: 7, kind: input, shape index: {}]
  %s8 = inlined_call_operand.vmem [shape: f32[16,8], index: 8, kind: input, shape index: {}]
  %s9 = inlined_call_operand.vmem [shape: f32[32,8], index: 9, kind: input, shape index: {}]
  %s10 = inlined_call_operand.vmem [shape: f32[32,8], index: 10, kind: input, shape index: {}]
  %s11 = inlined_call_operand.vmem [shape: f32[32,8], index: 11, kind: input, shape index: {}]
  %s12 = inlined_call_operand.vmem [shape: f32[32,8], index: 12, kind: input, shape index: {}]
  %s13 = inlined_call_operand.hbm [shape: f32[1,1], index: 13, kind: output, shape index: {0}]
  %s14 = inlined_call_operand.hbm [shape: f32[1,1], index: 14, kind: output, shape index: {1}]
  %15 = xla_tuple %s13, %s14
  %s16 = sld [smem:[#allocation0]]
  $region113: #{vae_loss.1} parent=0
    _
  %s18 = ssub.s32 1, %s16
  %s19 = scalar_select 0, %s18, %s16
  $region1: #{vae_loss.1} parent=0
    #allocation4 [shape = 'u8[512]{0}', space=smem, size = 0x200, scoped, tag = 'input window, operand 0, single buffered']
    #allocation5 [shape = 's32[2]{0}', space=sflag, size = 0x8, scoped, tag = 'scoped memory for vae_loss.1']
    #allocation6 [shape = 's32[2]{0}', space=sflag, size = 0x8, scoped, tag = 'scoped memory for vae_loss.1']
    #allocation7 [shape = 'u8[512]{0}', space=vmem, size = 0x400, scoped, tag = 'output window, operand 0, single buffered']
    #allocation8 [shape = 'u8[512]{0}', space=vmem, size = 0x400, scoped, tag = 'output window, operand 1, single buffered']
    #allocation9 [shape = 's32[1]{0}', space=sflag, size = 0x4, scoped, tag = 'scoped memory for vae_loss.1']
    %20 = vsyncpa [#allocation6], 0
    %21 = vsyncpa [#allocation5], 0
    %22 = vsyncpa [#allocation9], 0
    loop: start=0, step=1, limit=4
    $region2: #{vae_loss.1} parent=1 // loop_pre_header
      _
    $region3: #{vae_loss.1} parent=1 // loop_header
      %s24 = sphi 0, %s28
      %p25 = scmp.ge.s32.totalorder %s24, 4
      %s32 = sphi 0, %s32
      %s34 = sphi 0, %s32
      %s35 = sphi 0, %s34
      %s49 = sphi 0, %s35
      %s59 = sphi 0, %s61
      %s62 = sphi 0, %s59
      %s63 = sphi 0, %s62
      %s79 = sphi 0, %s63
      %s89 = sphi 0, %s91
      %s92 = sphi 0, %s89
      %s93 = sphi 0, %s92
      %s109 = sphi 0, %s93
      %s121 = sphi 0, %s123
      %s124 = sphi 0, %s121
      %s125 = sphi 0, %s124
      %s141 = sphi 0, %s125
      %s153 = sphi 0, %s155
      %s156 = sphi 0, %s153
      %s157 = sphi 0, %s156
      %s173 = sphi 0, %s157
      %s177 = sphi 0, %s177
      %s179 = sphi 0, %s177
      %s180 = sphi 0, %s179
      %s194 = sphi 0, %s180
      %s198 = sphi 0, %s198
      %s200 = sphi 0, %s198
      %s201 = sphi 0, %s200
      %s215 = sphi 0, %s201
      %s219 = sphi 0, %s219
      %s221 = sphi 0, %s219
      %s222 = sphi 0, %s221
      %s236 = sphi 0, %s222
      %s240 = sphi 0, %s240
      %s242 = sphi 0, %s240
      %s243 = sphi 0, %s242
      %s257 = sphi 0, %s243
      %s261 = sphi 0, %s261
      %s263 = sphi 0, %s261
      %s264 = sphi 0, %s263
      %s278 = sphi 0, %s264
      %s282 = sphi 0, %s282
      %s284 = sphi 0, %s282
      %s285 = sphi 0, %s284
      %s299 = sphi 0, %s285
      %s303 = sphi 0, %s303
      %s305 = sphi 0, %s303
      %s306 = sphi 0, %s305
      %s320 = sphi 0, %s306
      %s324 = sphi 0, %s324
      %s326 = sphi 0, %s324
      %s327 = sphi 0, %s326
      %s341 = sphi 0, %s327
      %s345 = sphi 0, %s345
      %s347 = sphi 0, %s345
      %s348 = sphi 0, %s347
      %s362 = sphi 0, %s348
      %s366 = sphi 0, %s366
      %s368 = sphi 0, %s366
      %s369 = sphi 0, %s368
      %s383 = sphi 0, %s369
    $region4: #{vae_loss.1} parent=1 // loop_header_branch
      %27 = sbr.rel (%p25) target = $region8
    $region5: #{vae_loss.1} parent=1 // loop_body
      %s29 = ssub.s32 %s24, 1
      %s30 = ssub.s32 %s24, 2
      %s31 = sadd.s32 %s24, 1
      %s33 = sadd.s32 %s32, 1
      %p36 = scmp.eq.s32.totalorder %s24, 1
      %p37 = scmp.ne.s32.totalorder %s32, %s34
      %p38 = scmp.eq.s32.totalorder %s24, 0
      %p39 = por %p37, %p38
      %p40 = scmp.ne.s32.totalorder %s32, %s34
      %p41 = scmp.eq.s32.totalorder %s29, 1
      %p42 = por %p40, %p41
      %p43 = scmp.ne.s32.totalorder %s34, %s35
      %p44 = scmp.eq.s32.totalorder %s29, 0
      %p45 = por %p43, %p44
      %p46 = scmp.ne.s32.totalorder %s34, %s35
      %p47 = scmp.eq.s32.totalorder %s30, 1
      %p48 = por %p46, %p47
      %p50 = scmp.ne.s32.totalorder %s35, %s49
      %p51 = scmp.eq.s32.totalorder %s30, 0
      %p52 = por %p50, %p51
      %p53 = scmp.lt.s32.totalorder %s24, 0
      %s54 = scalar_select %p53, %s24, 0
      %p55 = scmp.lt.s32.totalorder %s31, 0
      %s56 = scalar_select %p55, %s31, 0
      %s57 = ssub.s32 %s54, %s56
      %p58 = scmp.eq.s32.totalorder %s57, 0
      %s60 = sadd.s32 %s59, 1
      %s61 = scalar_select %p58, %s59, %s60
      %p64 = pneg %p58
      %p65 = scmp.eq.s32.totalorder %s24, 1
      %p66 = por %p64, %p65
      %p67 = scmp.ne.s32.totalorder %s59, %s62
      %p68 = scmp.eq.s32.totalorder %s24, 0
      %p69 = por %p67, %p68
      %p70 = scmp.ne.s32.totalorder %s59, %s62
      %p71 = scmp.eq.s32.totalorder %s29, 1
      %p72 = por %p70, %p71
      %p73 = scmp.ne.s32.totalorder %s62, %s63
      %p74 = scmp.eq.s32.totalorder %s29, 0
      %p75 = por %p73, %p74
      %p76 = scmp.ne.s32.totalorder %s62, %s63
      %p77 = scmp.eq.s32.totalorder %s30, 1
      %p78 = por %p76, %p77
      %p80 = scmp.ne.s32.totalorder %s63, %s79
      %p81 = scmp.eq.s32.totalorder %s30, 0
      %p82 = por %p80, %p81
      %p83 = scmp.lt.s32.totalorder %s24, 0
      %s84 = scalar_select %p83, %s24, 0
      %p85 = scmp.lt.s32.totalorder %s31, 0
      %s86 = scalar_select %p85, %s31, 0
      %s87 = ssub.s32 %s84, %s86
      %p88 = scmp.eq.s32.totalorder %s87, 0
      %s90 = sadd.s32 %s89, 1
      %s91 = scalar_select %p88, %s89, %s90
      %p94 = pneg %p88
      %p95 = scmp.eq.s32.totalorder %s24, 1
      %p96 = por %p94, %p95
      %p97 = scmp.ne.s32.totalorder %s89, %s92
      %p98 = scmp.eq.s32.totalorder %s24, 0
      %p99 = por %p97, %p98
      %p100 = scmp.ne.s32.totalorder %s89, %s92
      %p101 = scmp.eq.s32.totalorder %s29, 1
      %p102 = por %p100, %p101
      %p103 = scmp.ne.s32.totalorder %s92, %s93
      %p104 = scmp.eq.s32.totalorder %s29, 0
      %p105 = por %p103, %p104
      %p106 = scmp.ne.s32.totalorder %s92, %s93
      %p107 = scmp.eq.s32.totalorder %s30, 1
      %p108 = por %p106, %p107
      %p110 = scmp.ne.s32.totalorder %s93, %s109
      %p111 = scmp.eq.s32.totalorder %s30, 0
      %p112 = por %p110, %p111
      %s113 = ssub.s32 %s24, 1
      %p114 = scmp.gt.s32.totalorder %s113, 0
      %s115 = scalar_select %p114, %s113, 0
      %s116 = ssub.s32 %s31, 1
      %p117 = scmp.gt.s32.totalorder %s116, 0
      %s118 = scalar_select %p117, %s116, 0
      %s119 = ssub.s32 %s115, %s118
      %p120 = scmp.eq.s32.totalorder %s119, 0
      %s122 = sadd.s32 %s121, 1
      %s123 = scalar_select %p120, %s121, %s122
      %p126 = pneg %p120
      %p127 = scmp.eq.s32.totalorder %s24, 1
      %p128 = por %p126, %p127
      %p129 = scmp.ne.s32.totalorder %s121, %s124
      %p130 = scmp.eq.s32.totalorder %s24, 0
      %p131 = por %p129, %p130
      %p132 = scmp.ne.s32.totalorder %s121, %s124
      %p133 = scmp.eq.s32.totalorder %s29, 1
      %p134 = por %p132, %p133
      %p135 = scmp.ne.s32.totalorder %s124, %s125
      %p136 = scmp.eq.s32.totalorder %s29, 0
      %p137 = por %p135, %p136
      %p138 = scmp.ne.s32.totalorder %s124, %s125
      %p139 = scmp.eq.s32.totalorder %s30, 1
      %p140 = por %p138, %p139
      %p142 = scmp.ne.s32.totalorder %s125, %s141
      %p143 = scmp.eq.s32.totalorder %s30, 0
      %p144 = por %p142, %p143
      %s145 = ssub.s32 %s24, 1
      %p146 = scmp.gt.s32.totalorder %s145, 0
      %s147 = scalar_select %p146, %s145, 0
      %s148 = ssub.s32 %s31, 1
      %p149 = scmp.gt.s32.totalorder %s148, 0
      %s150 = scalar_select %p149, %s148, 0
      %s151 = ssub.s32 %s147, %s150
      %p152 = scmp.eq.s32.totalorder %s151, 0
      %s154 = sadd.s32 %s153, 1
      %s155 = scalar_select %p152, %s153, %s154
      %p158 = pneg %p152
      %p159 = scmp.eq.s32.totalorder %s24, 1
      %p160 = por %p158, %p159
      %p161 = scmp.ne.s32.totalorder %s153, %s156
      %p162 = scmp.eq.s32.totalorder %s24, 0
      %p163 = por %p161, %p162
      %p164 = scmp.ne.s32.totalorder %s153, %s156
      %p165 = scmp.eq.s32.totalorder %s29, 1
      %p166 = por %p164, %p165
      %p167 = scmp.ne.s32.totalorder %s156, %s157
      %p168 = scmp.eq.s32.totalorder %s29, 0
      %p169 = por %p167, %p168
      %p170 = scmp.ne.s32.totalorder %s156, %s157
      %p171 = scmp.eq.s32.totalorder %s30, 1
      %p172 = por %p170, %p171
      %p174 = scmp.ne.s32.totalorder %s157, %s173
      %p175 = scmp.eq.s32.totalorder %s30, 0
      %p176 = por %p174, %p175
      %s178 = sadd.s32 %s177, 1
      %p181 = scmp.eq.s32.totalorder %s24, 1
      %p182 = scmp.ne.s32.totalorder %s177, %s179
      %p183 = scmp.eq.s32.totalorder %s24, 0
      %p184 = por %p182, %p183
      %p185 = scmp.ne.s32.totalorder %s177, %s179
      %p186 = scmp.eq.s32.totalorder %s29, 1
      %p187 = por %p185, %p186
      %p188 = scmp.ne.s32.totalorder %s179, %s180
      %p189 = scmp.eq.s32.totalorder %s29, 0
      %p190 = por %p188, %p189
      %p191 = scmp.ne.s32.totalorder %s179, %s180
      %p192 = scmp.eq.s32.totalorder %s30, 1
      %p193 = por %p191, %p192
      %p195 = scmp.ne.s32.totalorder %s180, %s194
      %p196 = scmp.eq.s32.totalorder %s30, 0
      %p197 = por %p195, %p196
      %s199 = sadd.s32 %s198, 1
      %p202 = scmp.eq.s32.totalorder %s24, 1
      %p203 = scmp.ne.s32.totalorder %s198, %s200
      %p204 = scmp.eq.s32.totalorder %s24, 0
      %p205 = por %p203, %p204
      %p206 = scmp.ne.s32.totalorder %s198, %s200
      %p207 = scmp.eq.s32.totalorder %s29, 1
      %p208 = por %p206, %p207
      %p209 = scmp.ne.s32.totalorder %s200, %s201
      %p210 = scmp.eq.s32.totalorder %s29, 0
      %p211 = por %p209, %p210
      %p212 = scmp.ne.s32.totalorder %s200, %s201
      %p213 = scmp.eq.s32.totalorder %s30, 1
      %p214 = por %p212, %p213
      %p216 = scmp.ne.s32.totalorder %s201, %s215
      %p217 = scmp.eq.s32.totalorder %s30, 0
      %p218 = por %p216, %p217
      %s220 = sadd.s32 %s219, 1
      %p223 = scmp.eq.s32.totalorder %s24, 1
      %p224 = scmp.ne.s32.totalorder %s219, %s221
      %p225 = scmp.eq.s32.totalorder %s24, 0
      %p226 = por %p224, %p225
      %p227 = scmp.ne.s32.totalorder %s219, %s221
      %p228 = scmp.eq.s32.totalorder %s29, 1
      %p229 = por %p227, %p228
      %p230 = scmp.ne.s32.totalorder %s221, %s222
      %p231 = scmp.eq.s32.totalorder %s29, 0
      %p232 = por %p230, %p231
      %p233 = scmp.ne.s32.totalorder %s221, %s222
      %p234 = scmp.eq.s32.totalorder %s30, 1
      %p235 = por %p233, %p234
      %p237 = scmp.ne.s32.totalorder %s222, %s236
      %p238 = scmp.eq.s32.totalorder %s30, 0
      %p239 = por %p237, %p238
      %s241 = sadd.s32 %s240, 1
      %p244 = scmp.eq.s32.totalorder %s24, 1
      %p245 = scmp.ne.s32.totalorder %s240, %s242
      %p246 = scmp.eq.s32.totalorder %s24, 0
      %p247 = por %p245, %p246
      %p248 = scmp.ne.s32.totalorder %s240, %s242
      %p249 = scmp.eq.s32.totalorder %s29, 1
      %p250 = por %p248, %p249
      %p251 = scmp.ne.s32.totalorder %s242, %s243
      %p252 = scmp.eq.s32.totalorder %s29, 0
      %p253 = por %p251, %p252
      %p254 = scmp.ne.s32.totalorder %s242, %s243
      %p255 = scmp.eq.s32.totalorder %s30, 1
      %p256 = por %p254, %p255
      %p258 = scmp.ne.s32.totalorder %s243, %s257
      %p259 = scmp.eq.s32.totalorder %s30, 0
      %p260 = por %p258, %p259
      %s262 = sadd.s32 %s261, 1
      %p265 = scmp.eq.s32.totalorder %s24, 1
      %p266 = scmp.ne.s32.totalorder %s261, %s263
      %p267 = scmp.eq.s32.totalorder %s24, 0
      %p268 = por %p266, %p267
      %p269 = scmp.ne.s32.totalorder %s261, %s263
      %p270 = scmp.eq.s32.totalorder %s29, 1
      %p271 = por %p269, %p270
      %p272 = scmp.ne.s32.totalorder %s263, %s264
      %p273 = scmp.eq.s32.totalorder %s29, 0
      %p274 = por %p272, %p273
      %p275 = scmp.ne.s32.totalorder %s263, %s264
      %p276 = scmp.eq.s32.totalorder %s30, 1
      %p277 = por %p275, %p276
      %p279 = scmp.ne.s32.totalorder %s264, %s278
      %p280 = scmp.eq.s32.totalorder %s30, 0
      %p281 = por %p279, %p280
      %s283 = sadd.s32 %s282, 1
      %p286 = scmp.eq.s32.totalorder %s24, 1
      %p287 = scmp.ne.s32.totalorder %s282, %s284
      %p288 = scmp.eq.s32.totalorder %s24, 0
      %p289 = por %p287, %p288
      %p290 = scmp.ne.s32.totalorder %s282, %s284
      %p291 = scmp.eq.s32.totalorder %s29, 1
      %p292 = por %p290, %p291
      %p293 = scmp.ne.s32.totalorder %s284, %s285
      %p294 = scmp.eq.s32.totalorder %s29, 0
      %p295 = por %p293, %p294
      %p296 = scmp.ne.s32.totalorder %s284, %s285
      %p297 = scmp.eq.s32.totalorder %s30, 1
      %p298 = por %p296, %p297
      %p300 = scmp.ne.s32.totalorder %s285, %s299
      %p301 = scmp.eq.s32.totalorder %s30, 0
      %p302 = por %p300, %p301
      %s304 = sadd.s32 %s303, 1
      %p307 = scmp.eq.s32.totalorder %s24, 1
      %p308 = scmp.ne.s32.totalorder %s303, %s305
      %p309 = scmp.eq.s32.totalorder %s24, 0
      %p310 = por %p308, %p309
      %p311 = scmp.ne.s32.totalorder %s303, %s305
      %p312 = scmp.eq.s32.totalorder %s29, 1
      %p313 = por %p311, %p312
      %p314 = scmp.ne.s32.totalorder %s305, %s306
      %p315 = scmp.eq.s32.totalorder %s29, 0
      %p316 = por %p314, %p315
      %p317 = scmp.ne.s32.totalorder %s305, %s306
      %p318 = scmp.eq.s32.totalorder %s30, 1
      %p319 = por %p317, %p318
      %p321 = scmp.ne.s32.totalorder %s306, %s320
      %p322 = scmp.eq.s32.totalorder %s30, 0
      %p323 = por %p321, %p322
      %s325 = sadd.s32 %s324, 1
      %p328 = scmp.eq.s32.totalorder %s24, 1
      %p329 = scmp.ne.s32.totalorder %s324, %s326
      %p330 = scmp.eq.s32.totalorder %s24, 0
      %p331 = por %p329, %p330
      %p332 = scmp.ne.s32.totalorder %s324, %s326
      %p333 = scmp.eq.s32.totalorder %s29, 1
      %p334 = por %p332, %p333
      %p335 = scmp.ne.s32.totalorder %s326, %s327
      %p336 = scmp.eq.s32.totalorder %s29, 0
      %p337 = por %p335, %p336
      %p338 = scmp.ne.s32.totalorder %s326, %s327
      %p339 = scmp.eq.s32.totalorder %s30, 1
      %p340 = por %p338, %p339
      %p342 = scmp.ne.s32.totalorder %s327, %s341
      %p343 = scmp.eq.s32.totalorder %s30, 0
      %p344 = por %p342, %p343
      %s346 = sadd.s32 %s345, 1
      %p349 = scmp.eq.s32.totalorder %s24, 1
      %p350 = scmp.ne.s32.totalorder %s345, %s347
      %p351 = scmp.eq.s32.totalorder %s24, 0
      %p352 = por %p350, %p351
      %p353 = scmp.ne.s32.totalorder %s345, %s347
      %p354 = scmp.eq.s32.totalorder %s29, 1
      %p355 = por %p353, %p354
      %p356 = scmp.ne.s32.totalorder %s347, %s348
      %p357 = scmp.eq.s32.totalorder %s29, 0
      %p358 = por %p356, %p357
      %p359 = scmp.ne.s32.totalorder %s347, %s348
      %p360 = scmp.eq.s32.totalorder %s30, 1
      %p361 = por %p359, %p360
      %p363 = scmp.ne.s32.totalorder %s348, %s362
      %p364 = scmp.eq.s32.totalorder %s30, 0
      %p365 = por %p363, %p364
      %s367 = sadd.s32 %s366, 1
      %p370 = scmp.eq.s32.totalorder %s24, 1
      %p371 = scmp.ne.s32.totalorder %s366, %s368
      %p372 = scmp.eq.s32.totalorder %s24, 0
      %p373 = por %p371, %p372
      %p374 = scmp.ne.s32.totalorder %s366, %s368
      %p375 = scmp.eq.s32.totalorder %s29, 1
      %p376 = por %p374, %p375
      %p377 = scmp.ne.s32.totalorder %s368, %s369
      %p378 = scmp.eq.s32.totalorder %s29, 0
      %p379 = por %p377, %p378
      %p380 = scmp.ne.s32.totalorder %s368, %s369
      %p381 = scmp.eq.s32.totalorder %s30, 1
      %p382 = por %p380, %p381
      %p384 = scmp.ne.s32.totalorder %s369, %s383
      %p385 = scmp.eq.s32.totalorder %s30, 0
      %p386 = por %p384, %p385
      %p387 = scmp.le.s32.totalorder 1, %s24
      %p388 = scmp.lt.s32.totalorder %s24, 3
      %p389 = pnand %p387, %p388
      %p390 = pneg %p389
      // Predicated region
      $region9: #{vae_loss.1} parent=5 // pred_check
        _
      $region10: #{vae_loss.1} parent=5 // pred_check_branch
        %392 = sbr.rel (%p389) target = $region12
      $region11: #{vae_loss.1} parent=5 // pred_region
        %s393 = ssub.s32 %s24, 1
        // Predicated region
        $region13: #{vae_loss.1} parent=11 // pred_check
          %p394 = pneg %p45
        $region14: #{vae_loss.1} parent=11 // pred_check_branch
          %396 = sbr.rel (%p394) target = $region16
        $region15: #{vae_loss.1} parent=11 // pred_region
          %398 = vsyncadd [#allocation6], 0
          %s400 = sshll.u32 %s0, 4
          %s401 = int_to_ptr.vmem [resolvable:$true] %s400
          %403 = dma.vmem_to_smem %s401, 16, [#allocation4], [#allocation6]
        $region16: #{vae_loss.1} parent=11 // pred_fallthru
          _
        // Predicated region
        $region17: #{vae_loss.1} parent=11 // pred_check
          %p404 = pneg %p190
        $region18: #{vae_loss.1} parent=11 // pred_check_branch
          %406 = sbr.rel (%p404) target = $region20
        $region19: #{vae_loss.1} parent=11 // pred_region
          _
        $region20: #{vae_loss.1} parent=11 // pred_fallthru
          _
        // Predicated region
        $region21: #{vae_loss.1} parent=11 // pred_check
          %p407 = pneg %p211
        $region22: #{vae_loss.1} parent=11 // pred_check_branch
          %409 = sbr.rel (%p407) target = $region24
        $region23: #{vae_loss.1} parent=11 // pred_region
          _
        $region24: #{vae_loss.1} parent=11 // pred_fallthru
          _
        // Predicated region
        $region25: #{vae_loss.1} parent=11 // pred_check
          %p410 = pneg %p232
        $region26: #{vae_loss.1} parent=11 // pred_check_branch
          %412 = sbr.rel (%p410) target = $region28
        $region27: #{vae_loss.1} parent=11 // pred_region
          _
        $region28: #{vae_loss.1} parent=11 // pred_fallthru
          _
        // Predicated region
        $region29: #{vae_loss.1} parent=11 // pred_check
          %p413 = pneg %p253
        $region30: #{vae_loss.1} parent=11 // pred_check_branch
          %415 = sbr.rel (%p413) target = $region32
        $region31: #{vae_loss.1} parent=11 // pred_region
          _
        $region32: #{vae_loss.1} parent=11 // pred_fallthru
          _
        // Predicated region
        $region33: #{vae_loss.1} parent=11 // pred_check
          %p416 = pneg %p274
        $region34: #{vae_loss.1} parent=11 // pred_check_branch
          %418 = sbr.rel (%p416) target = $region36
        $region35: #{vae_loss.1} parent=11 // pred_region
          _
        $region36: #{vae_loss.1} parent=11 // pred_fallthru
          _
        // Predicated region
        $region37: #{vae_loss.1} parent=11 // pred_check
          %p419 = pneg %p295
        $region38: #{vae_loss.1} parent=11 // pred_check_branch
          %421 = sbr.rel (%p419) target = $region40
        $region39: #{vae_loss.1} parent=11 // pred_region
          _
        $region40: #{vae_loss.1} parent=11 // pred_fallthru
          _
        // Predicated region
        $region41: #{vae_loss.1} parent=11 // pred_check
          %p422 = pneg %p316
        $region42: #{vae_loss.1} parent=11 // pred_check_branch
          %424 = sbr.rel (%p422) target = $region44
        $region43: #{vae_loss.1} parent=11 // pred_region
          _
        $region44: #{vae_loss.1} parent=11 // pred_fallthru
          _
        // Predicated region
        $region45: #{vae_loss.1} parent=11 // pred_check
          %p425 = pneg %p337
        $region46: #{vae_loss.1} parent=11 // pred_check_branch
          %427 = sbr.rel (%p425) target = $region48
        $region47: #{vae_loss.1} parent=11 // pred_region
          _
        $region48: #{vae_loss.1} parent=11 // pred_fallthru
          _
      $region12: #{vae_loss.1} parent=5 // pred_fallthru
        _
      %p428 = scmp.lt.s32.totalorder %s24, 2
      // Predicated region
      $region49: #{vae_loss.1} parent=5 // pred_check
        %p429 = pneg %p428
      $region50: #{vae_loss.1} parent=5 // pred_check_branch
        %431 = sbr.rel (%p429) target = $region52
      $region51: #{vae_loss.1} parent=5 // pred_region
        // Predicated region
        $region53: #{vae_loss.1} parent=51 // pred_check
          %p432 = pneg %p69
        $region54: #{vae_loss.1} parent=51 // pred_check_branch
          %434 = sbr.rel (%p432) target = $region56
        $region55: #{vae_loss.1} parent=51 // pred_region
          %p435 = scmp.lt.s32.totalorder %s24, 0
          %s436 = scalar_select %p435, %s24, 0
          %s437 = smul.u32 2, %s436
          %p438 = scmp.lt.s32.totalorder %s437, 1
          %s439 = scalar_select %p438, %s437, 1
          %s440 = smul.addr %s439, 8
          %s441 = scalar_lea.vmem %s1, %s440
          %p442 = scmp.lt.s32.totalorder %s24, 0
          %s443 = scalar_select %p442, %s24, 0
          %s444 = smul.u32 2, %s443
        $region56: #{vae_loss.1} parent=51 // pred_fallthru
          _
        // Predicated region
        $region57: #{vae_loss.1} parent=51 // pred_check
          %p445 = pneg %p99
        $region58: #{vae_loss.1} parent=51 // pred_check_branch
          %447 = sbr.rel (%p445) target = $region60
        $region59: #{vae_loss.1} parent=51 // pred_region
          %p448 = scmp.lt.s32.totalorder %s24, 0
          %s449 = scalar_select %p448, %s24, 0
          %s450 = smul.u32 2, %s449
          %p451 = scmp.lt.s32.totalorder %s450, 1
          %s452 = scalar_select %p451, %s450, 1
          %s453 = smul.addr %s452, 8
          %s454 = scalar_lea.vmem %s2, %s453
          %p455 = scmp.lt.s32.totalorder %s24, 0
          %s456 = scalar_select %p455, %s24, 0
          %s457 = smul.u32 2, %s456
        $region60: #{vae_loss.1} parent=51 // pred_fallthru
          _
        // Predicated region
        $region61: #{vae_loss.1} parent=51 // pred_check
          %p458 = pneg %p131
        $region62: #{vae_loss.1} parent=51 // pred_check_branch
          %460 = sbr.rel (%p458) target = $region64
        $region63: #{vae_loss.1} parent=51 // pred_region
          %s461 = ssub.s32 %s24, 1
          %p462 = scmp.gt.s32.totalorder %s461, 0
          %s463 = scalar_select %p462, %s461, 0
          %s464 = smul.u32 2, %s463
          %p465 = scmp.lt.s32.totalorder %s464, 1
          %s466 = scalar_select %p465, %s464, 1
          %s467 = smul.addr %s466, 8
          %s468 = scalar_lea.vmem %s3, %s467
          %s469 = ssub.s32 %s24, 1
          %p470 = scmp.gt.s32.totalorder %s469, 0
          %s471 = scalar_select %p470, %s469, 0
          %s472 = smul.u32 2, %s471
        $region64: #{vae_loss.1} parent=51 // pred_fallthru
          _
        // Predicated region
        $region65: #{vae_loss.1} parent=51 // pred_check
          %p473 = pneg %p163
        $region66: #{vae_loss.1} parent=51 // pred_check_branch
          %475 = sbr.rel (%p473) target = $region68
        $region67: #{vae_loss.1} parent=51 // pred_region
          %s476 = ssub.s32 %s24, 1
          %p477 = scmp.gt.s32.totalorder %s476, 0
          %s478 = scalar_select %p477, %s476, 0
          %s479 = smul.u32 2, %s478
          %p480 = scmp.lt.s32.totalorder %s479, 1
          %s481 = scalar_select %p480, %s479, 1
          %s482 = smul.addr %s481, 8
          %s483 = scalar_lea.vmem %s4, %s482
          %s484 = ssub.s32 %s24, 1
          %p485 = scmp.gt.s32.totalorder %s484, 0
          %s486 = scalar_select %p485, %s484, 0
          %s487 = smul.u32 2, %s486
        $region68: #{vae_loss.1} parent=51 // pred_fallthru
          _
      $region52: #{vae_loss.1} parent=5 // pred_fallthru
        _
      %p488 = scmp.le.s32.totalorder 1, %s24
      %p489 = scmp.lt.s32.totalorder %s24, 3
      %p490 = pnand %p488, %p489
      %p491 = pneg %p490
      // Predicated region
      $region69: #{vae_loss.1} parent=5 // pred_check
        _
      $region70: #{vae_loss.1} parent=5 // pred_check_branch
        %493 = sbr.rel (%p490) target = $region72
      $region71: #{vae_loss.1} parent=5 // pred_region
        %s494 = ssub.s32 %s24, 1
        // Predicated region
        $region73: #{vae_loss.1} parent=71 // pred_check
          %p495 = pneg %p45
        $region74: #{vae_loss.1} parent=71 // pred_check_branch
          %497 = sbr.rel (%p495) target = $region76
        $region75: #{vae_loss.1} parent=71 // pred_region
          %499 = dma.done [#allocation6], 16
        $region76: #{vae_loss.1} parent=71 // pred_fallthru
          _
        %500 = sfence
        %p501 = pneg %p45
        %p502 = pneg %p42
        %p503 = scmp.lt.s32.totalorder %s29, 0
        %s504 = scalar_select %p503, %s29, 0
        %s505 = smul.u32 2, %s504
        %p506 = scmp.lt.s32.totalorder %s505, 1
        %s507 = scalar_select %p506, %s505, 1
        %s508 = smul.addr %s507, 8
        %s509 = scalar_lea.vmem %s1, %s508
        %p510 = pneg %p75
        %p511 = pneg %p72
        %p512 = scmp.lt.s32.totalorder %s29, 0
        %s513 = scalar_select %p512, %s29, 0
        %s514 = smul.u32 2, %s513
        %p515 = scmp.lt.s32.totalorder %s514, 1
        %s516 = scalar_select %p515, %s514, 1
        %s517 = smul.addr %s516, 8
        %s518 = scalar_lea.vmem %s2, %s517
        %p519 = pneg %p105
        %p520 = pneg %p102
        %s521 = ssub.s32 %s29, 1
        %p522 = scmp.gt.s32.totalorder %s521, 0
        %s523 = scalar_select %p522, %s521, 0
        %s524 = smul.u32 2, %s523
        %p525 = scmp.lt.s32.totalorder %s524, 1
        %s526 = scalar_select %p525, %s524, 1
        %s527 = smul.addr %s526, 8
        %s528 = scalar_lea.vmem %s3, %s527
        %p529 = pneg %p137
        %p530 = pneg %p134
        %s531 = ssub.s32 %s29, 1
        %p532 = scmp.gt.s32.totalorder %s531, 0
        %s533 = scalar_select %p532, %s531, 0
        %s534 = smul.u32 2, %s533
        %p535 = scmp.lt.s32.totalorder %s534, 1
        %s536 = scalar_select %p535, %s534, 1
        %s537 = smul.addr %s536, 8
        %s538 = scalar_lea.vmem %s4, %s537
        %p539 = pneg %p169
        %p540 = pneg %p166
        %p541 = pneg %p190
        %p542 = pneg %p187
        %p543 = pneg %p211
        %p544 = pneg %p208
        %p545 = pneg %p232
        %p546 = pneg %p229
        %p547 = pneg %p253
        %p548 = pneg %p250
        %p549 = pneg %p274
        %p550 = pneg %p271
        %p551 = pneg %p295
        %p552 = pneg %p292
        %p553 = pneg %p316
        %p554 = pneg %p313
        %p555 = pneg %p337
        %p556 = pneg %p334
        %p557 = pneg %p358
        %p558 = pneg %p355
        %p559 = pneg %p379
        %p560 = pneg %p376
        %p561 = scmp.lt.s32.totalorder %s29, 0
        %s562 = scalar_select %p561, %s29, 0
        %s563 = smul.u32 2, %s562
        %p564 = scmp.lt.s32.totalorder %s563, 1
        %s565 = scalar_select %p564, %s563, 1
        %s566 = smul.addr %s565, 8
        %s567 = scalar_lea.vmem %s1, %s566
        %p568 = scmp.lt.s32.totalorder %s29, 0
        %s569 = scalar_select %p568, %s29, 0
        %s570 = smul.u32 2, %s569
        %p571 = scmp.lt.s32.totalorder %s29, 0
        %s572 = scalar_select %p571, %s29, 0
        %s573 = smul.u32 2, %s572
        %p574 = scmp.lt.s32.totalorder %s573, 1
        %s575 = scalar_select %p574, %s573, 1
        %s576 = smul.addr %s575, 8
        %s577 = scalar_lea.vmem %s2, %s576
        %p578 = scmp.lt.s32.totalorder %s29, 0
        %s579 = scalar_select %p578, %s29, 0
        %s580 = smul.u32 2, %s579
        %s581 = ssub.s32 %s29, 1
        %p582 = scmp.gt.s32.totalorder %s581, 0
        %s583 = scalar_select %p582, %s581, 0
        %s584 = smul.u32 2, %s583
        %p585 = scmp.lt.s32.totalorder %s584, 1
        %s586 = scalar_select %p585, %s584, 1
        %s587 = smul.addr %s586, 8
        %s588 = scalar_lea.vmem %s3, %s587
        %s589 = ssub.s32 %s29, 1
        %p590 = scmp.gt.s32.totalorder %s589, 0
        %s591 = scalar_select %p590, %s589, 0
        %s592 = smul.u32 2, %s591
        %s593 = ssub.s32 %s29, 1
        %p594 = scmp.gt.s32.totalorder %s593, 0
        %s595 = scalar_select %p594, %s593, 0
        %s596 = smul.u32 2, %s595
        %p597 = scmp.lt.s32.totalorder %s596, 1
        %s598 = scalar_select %p597, %s596, 1
        %s599 = smul.addr %s598, 8
        %s600 = scalar_lea.vmem %s4, %s599
        %s601 = ssub.s32 %s29, 1
        %p602 = scmp.gt.s32.totalorder %s601, 0
        %s603 = scalar_select %p602, %s601, 0
        %s604 = smul.u32 2, %s603
        %p605 = scmp.eq.s32.totalorder %s29, 0
        // Predicated region
        $region77: #{vae_loss.1} parent=71 // pred_check
          %p606 = pneg %p605
        $region78: #{vae_loss.1} parent=71 // pred_check_branch
          %608 = sbr.rel (%p606) target = $region80
        $region79: #{vae_loss.1} parent=71 // pred_region
          %vm609 = vcmask 130048
          %610 = vst.msk [vmem:[#allocation2] sm:$0xff] %vm609, 0.0
          %611 = vst.msk [vmem:[#allocation2 + $0x8] sm:$0xff] %vm609, 0.0
          %vm612 = vcmask 261120
          %613 = vst.msk [vmem:[#allocation3] sm:$0xff] %vm612, 0.0
          %614 = vst.msk [vmem:[#allocation3 + $0x8] sm:$0xff] %vm612, 0.0
        $region80: #{vae_loss.1} parent=71 // pred_fallthru
          _
        %p615 = scmp.lt.s32.totalorder %s29, 1
        // Predicated region
        $region81: #{vae_loss.1} parent=71 // pred_check
          %p616 = pneg %p615
        $region82: #{vae_loss.1} parent=71 // pred_check_branch
          %618 = sbr.rel (%p616) target = $region84
        $region83: #{vae_loss.1} parent=71 // pred_region
          %s619 = smul.u32 %s29, 16
          %s620 = ssub.s32 16, %s619
          %p621 = scmp.lt.s32.totalorder %s620, 16
          %s622 = scalar_select %p621, %s620, 16
          %s623 = sld [smem:[#allocation4]]
          %s624 = sld [smem:[#allocation4 + $0x1]]
          %v625 = vld [vmem:[%s567] sm:$0xff]
          %v626 = vld [vmem:[%s567 + $0x8] sm:$0xff]
          %v627 = vld [vmem:[%s577] sm:$0xff]
          %v628 = vld [vmem:[%s577 + $0x8] sm:$0xff]
          %v629 = vsub.f32 0.0, %v625
          %v630 = vsub.f32 0.0, %v626
          %v631 = vmax.f32 %v629, 0.0
          %v632 = vmax.f32 %v630, 0.0
          %v633 = vand.u32 2147483647, %v625
          %v634 = vand.u32 2147483647, %v626
          %v635 = vsub.f32 0.0, %v633
          %v636 = vsub.f32 0.0, %v634
          %v637 = vmul.f32 %v635, 1.442695
          %v638 = vpow.pop %v637
          %v639 = vmul.f32 %v636, 1.442695
          %v640 = vpow.pop %v639
          %v641 = vadd.f32 %v638, 1.0
          %v642 = vlog2.pop %v641
          %v643 = vmul.f32 %v642, 0.6931472
          %v644 = vmul.f32 -0.5, %v638
          %v645 = vadd.f32 %v644, 1.0
          %v646 = vmul.f32 %v645, %v638
          %v647 = vand.u32 2147483647, %v638
          %vm648 = vcmp.lt.f32.partialorder %v647, 0.0004427343
          %v649 = vsel %vm648, %v646, %v643
          %v650 = vadd.f32 %v640, 1.0
          %v651 = vlog2.pop %v650
          %v652 = vmul.f32 %v651, 0.6931472
          %v653 = vmul.f32 -0.5, %v640
          %v654 = vadd.f32 %v653, 1.0
          %v655 = vmul.f32 %v654, %v640
          %v656 = vand.u32 2147483647, %v640
          %vm657 = vcmp.lt.f32.partialorder %v656, 0.0004427343
          %v658 = vsel %vm657, %v655, %v652
          %v659 = vadd.f32 %v631, %v649
          %v660 = vadd.f32 %v632, %v658
          %vm661 = vcmp.ne.f32.partialorder %v627, 0.0
          %vm662 = vcmp.ne.f32.partialorder %v628, 0.0
          %v663 = vstv %s624
          %v664 = vmul.f32 %v663, %v659
          %v665 = vmul.f32 %v663, %v660
          %v666 = vadd.f32 %v625, %v659
          %v667 = vadd.f32 %v626, %v660
          %v668 = vstv %s623
          %v669 = vmul.f32 %v668, %v666
          %v670 = vmul.f32 %v668, %v667
          %v671 = vsel %vm661, %v664, %v669
          %v672 = vsel %vm662, %v665, %v670
          %v673 = vlaneseq
          %v674 = vshrl.u32 %v673, 7
          %v675 = vadd.s32 %v674, 8
          %v676 = vstv %s622
          %vm677 = vcmp.lt.s32.totalorder %v674, %v676
          %vm678 = vcmp.lt.s32.totalorder %v675, %v676
          %v679 = vsel %vm677, %v671, 0.0
          %v680 = vsel %vm678, %v672, 0.0
          %v681 = vld [vmem:[#allocation2] sm:$0xff]
          %v682 = vld [vmem:[#allocation2 + $0x8] sm:$0xff]
          %v683 = vadd.f32 %v681, %v679
          %v684 = vadd.f32 %v682, %v680
          %vm685 = vcmask 130048
          %686 = vst.msk [vmem:[#allocation2] sm:$0xff] %vm685, %v683
          %687 = vst.msk [vmem:[#allocation2 + $0x8] sm:$0xff] %vm685, %v684
        $region84: #{vae_loss.1} parent=71 // pred_fallthru
          _
        %p688 = scmp.ge.s32.totalorder %s29, 1
        // Predicated region
        $region85: #{vae_loss.1} parent=71 // pred_check
          %p689 = pneg %p688
        $region86: #{vae_loss.1} parent=71 // pred_check_branch
          %691 = sbr.rel (%p689) target = $region88
        $region87: #{vae_loss.1} parent=71 // pred_region
          %s692 = ssub.s32 %s29, 1
          %s693 = smul.u32 %s692, 16
          %s694 = ssub.s32 16, %s693
          %p695 = scmp.lt.s32.totalorder %s694, 16
          %s696 = scalar_select %p695, %s694, 16
          %s697 = sld [smem:[#allocation4 + $0x2]]
          %s698 = sld [smem:[#allocation4 + $0x3]]
          %v699 = vld [vmem:[%s588] sm:$0xff]
          %v700 = vld [vmem:[%s588 + $0x8] sm:$0xff]
          %v701 = vld [vmem:[%s600] sm:$0xff]
          %v702 = vld [vmem:[%s600 + $0x8] sm:$0xff]
          %v703 = vsub.f32 0.0, %v699
          %v704 = vsub.f32 0.0, %v700
          %v705 = vmax.f32 %v703, 0.0
          %v706 = vmax.f32 %v704, 0.0
          %v707 = vand.u32 2147483647, %v699
          %v708 = vand.u32 2147483647, %v700
          %v709 = vsub.f32 0.0, %v707
          %v710 = vsub.f32 0.0, %v708
          %v711 = vmul.f32 %v709, 1.442695
          %v712 = vpow.pop %v711
          %v713 = vmul.f32 %v710, 1.442695
          %v714 = vpow.pop %v713
          %v715 = vadd.f32 %v712, 1.0
          %v716 = vlog2.pop %v715
          %v717 = vmul.f32 %v716, 0.6931472
          %v718 = vmul.f32 -0.5, %v712
          %v719 = vadd.f32 %v718, 1.0
          %v720 = vmul.f32 %v719, %v712
          %v721 = vand.u32 2147483647, %v712
          %vm722 = vcmp.lt.f32.partialorder %v721, 0.0004427343
          %v723 = vsel %vm722, %v720, %v717
          %v724 = vadd.f32 %v714, 1.0
          %v725 = vlog2.pop %v724
          %v726 = vmul.f32 %v725, 0.6931472
          %v727 = vmul.f32 -0.5, %v714
          %v728 = vadd.f32 %v727, 1.0
          %v729 = vmul.f32 %v728, %v714
          %v730 = vand.u32 2147483647, %v714
          %vm731 = vcmp.lt.f32.partialorder %v730, 0.0004427343
          %v732 = vsel %vm731, %v729, %v726
          %v733 = vadd.f32 %v705, %v723
          %v734 = vadd.f32 %v706, %v732
          %vm735 = vcmp.ne.f32.partialorder %v701, 0.0
          %vm736 = vcmp.ne.f32.partialorder %v702, 0.0
          %v737 = vstv %s698
          %v738 = vmul.f32 %v737, %v733
          %v739 = vmul.f32 %v737, %v734
          %v740 = vadd.f32 %v699, %v733
          %v741 = vadd.f32 %v700, %v734
          %v742 = vstv %s697
          %v743 = vmul.f32 %v742, %v740
          %v744 = vmul.f32 %v742, %v741
          %v745 = vsel %vm735, %v738, %v743
          %v746 = vsel %vm736, %v739, %v744
          %v747 = vlaneseq
          %v748 = vshrl.u32 %v747, 7
          %v749 = vadd.s32 %v748, 8
          %v750 = vstv %s696
          %vm751 = vcmp.lt.s32.totalorder %v748, %v750
          %vm752 = vcmp.lt.s32.totalorder %v749, %v750
          %v753 = vsel %vm751, %v745, 0.0
          %v754 = vsel %vm752, %v746, 0.0
          %v755 = vld [vmem:[#allocation3] sm:$0xff]
          %v756 = vld [vmem:[#allocation3 + $0x8] sm:$0xff]
          %v757 = vadd.f32 %v755, %v753
          %v758 = vadd.f32 %v756, %v754
          %vm759 = vcmask 261120
          %760 = vst.msk [vmem:[#allocation3] sm:$0xff] %vm759, %v757
          %761 = vst.msk [vmem:[#allocation3 + $0x8] sm:$0xff] %vm759, %v758
        $region88: #{vae_loss.1} parent=71 // pred_fallthru
          _
        %p762 = scmp.eq.s32.totalorder %s29, 1
        // Predicated region
        $region89: #{vae_loss.1} parent=71 // pred_check
          %p763 = pneg %p762
        $region90: #{vae_loss.1} parent=71 // pred_check_branch
          %765 = sbr.rel (%p763) target = $region92
        $region91: #{vae_loss.1} parent=71 // pred_region
          %v766 = vld [vmem:[%s5] sm:$0xff]
          %v767 = vld [vmem:[%s5 + $0x8] sm:$0xff]
          %v768 = vld [vmem:[%s6] sm:$0xff]
          %v769 = vld [vmem:[%s6 + $0x8] sm:$0xff]
          %v770 = vld [vmem:[%s7] sm:$0xff]
          %v771 = vld [vmem:[%s7 + $0x8] sm:$0xff]
          %v772 = vld [vmem:[%s8] sm:$0xff]
          %v773 = vld [vmem:[%s8 + $0x8] sm:$0xff]
          %v774 = vrcp.pop %v772
          %v775 = vmul.f32 %v772, %v774
          %v776 = vsub.f32 1.0, %v775
          %v777 = vmul.f32 %v774, %v776
          %v778 = vadd.f32 %v774, %v777
          %vm779 = vweird.f32 %v772
          %vm780 = vweird.f32 %v774
          %vm781 = vmor %vm779, %vm780
          %v782 = vsel %vm781, %v774, %v778
          %v783 = vand.u32 2147483647, %v772
          %vm784 = vcmp.eq.f32.partialorder %v783, 8.507059e+37
          %v785 = vand.u32 %v772, 2147483648
          %v786 = vor.u32 1.1754944e-38, %v785
          %v787 = vsel %vm784, %v786, %v782
          %v788 = vrcp.pop %v773
          %v789 = vmul.f32 %v773, %v788
          %v790 = vsub.f32 1.0, %v789
          %v791 = vmul.f32 %v788, %v790
          %v792 = vadd.f32 %v788, %v791
          %vm793 = vweird.f32 %v773
          %vm794 = vweird.f32 %v788
          %vm795 = vmor %vm793, %vm794
          %v796 = vsel %vm795, %v788, %v792
          %v797 = vand.u32 2147483647, %v773
          %vm798 = vcmp.eq.f32.partialorder %v797, 8.507059e+37
          %v799 = vand.u32 %v773, 2147483648
          %v800 = vor.u32 1.1754944e-38, %v799
          %v801 = vsel %vm798, %v800, %v796
          %v802 = vmul.f32 %v768, %v787
          %v803 = vmul.f32 %v769, %v801
          %v804 = vmul.f32 %v802, %v802
          %v805 = vmul.f32 %v803, %v803
          %v806 = vsub.f32 %v766, %v770
          %v807 = vsub.f32 %v767, %v771
          %v808 = vmul.f32 %v806, %v787
          %v809 = vmul.f32 %v807, %v801
          %v810 = vmul.f32 %v808, %v808
          %v811 = vmul.f32 %v809, %v809
          %v812 = vadd.f32 %v804, %v810
          %v813 = vadd.f32 %v805, %v811
          %v814 = vsub.f32 %v812, 1.0
          %v815 = vsub.f32 %v813, 1.0
          %v816 = vlog2.pop %v804
          %v817 = vmul.f32 %v816, 0.6931472
          %v818 = vlog2.pop %v805
          %v819 = vmul.f32 %v818, 0.6931472
          %v820 = vsub.f32 %v814, %v817
          %v821 = vsub.f32 %v815, %v819
          %v822 = vmul.f32 %v820, 0.5
          %v823 = vmul.f32 %v821, 0.5
          %vm824 = vcmask 64512
          %v825 = vsel %vm824, %v822, 0.0
          %v826 = vsel %vm824, %v823, 0.0
          %v827 = vadd.f32 %v825, %v826
          %828 = vadd.xlane.f32.xlu0 %v827
          %v829 = vpop.xlane.xlu0 %828
          %v830 = vrot.slane %v829, 4
          %v831 = vadd.f32 %v829, %v830
          %v832 = vrot.slane %v831, 2
          %v833 = vadd.f32 %v831, %v832
          %v834 = vrot.slane %v833, 1
          %v835 = vadd.f32 %v833, %v834
          %s836 = vtos %v835
          %v837 = vld [vmem:[%s9] sm:$0xff]
          %v838 = vld [vmem:[%s9 + $0x8] sm:$0xff]
          %v839 = vld [vmem:[%s9 + $0x10] sm:$0xff]
          %v840 = vld [vmem:[%s9 + $0x18] sm:$0xff]
          %v841 = vld [vmem:[%s10] sm:$0xff]
          %v842 = vld [vmem:[%s10 + $0x8] sm:$0xff]
          %v843 = vld [vmem:[%s10 + $0x10] sm:$0xff]
          %v844 = vld [vmem:[%s10 + $0x18] sm:$0xff]
          %v845 = vld [vmem:[%s11] sm:$0xff]
          %v846 = vld [vmem:[%s11 + $0x8] sm:$0xff]
          %v847 = vld [vmem:[%s11 + $0x10] sm:$0xff]
          %v848 = vld [vmem:[%s11 + $0x18] sm:$0xff]
          %v849 = vld [vmem:[%s12] sm:$0xff]
          %v850 = vld [vmem:[%s12 + $0x8] sm:$0xff]
          %v851 = vld [vmem:[%s12 + $0x10] sm:$0xff]
          %v852 = vld [vmem:[%s12 + $0x18] sm:$0xff]
          %v853 = vrcp.pop %v849
          %v854 = vmul.f32 %v849, %v853
          %v855 = vsub.f32 1.0, %v854
          %v856 = vmul.f32 %v853, %v855
          %v857 = vadd.f32 %v853, %v856
          %vm858 = vweird.f32 %v849
          %vm859 = vweird.f32 %v853
          %vm860 = vmor %vm858, %vm859
          %v861 = vsel %vm860, %v853, %v857
          %v862 = vand.u32 2147483647, %v849
          %vm863 = vcmp.eq.f32.partialorder %v862, 8.507059e+37
          %v864 = vand.u32 %v849, 2147483648
          %v865 = vor.u32 1.1754944e-38, %v864
          %v866 = vsel %vm863, %v865, %v861
          %v867 = vrcp.pop %v850
          %v868 = vmul.f32 %v850, %v867
          %v869 = vsub.f32 1.0, %v868
          %v870 = vmul.f32 %v867, %v869
          %v871 = vadd.f32 %v867, %v870
          %vm872 = vweird.f32 %v850
          %vm873 = vweird.f32 %v867
          %vm874 = vmor %vm872, %vm873
          %v875 = vsel %vm874, %v867, %v871
          %v876 = vand.u32 2147483647, %v850
          %vm877 = vcmp.eq.f32.partialorder %v876, 8.507059e+37
          %v878 = vand.u32 %v850, 2147483648
          %v879 = vor.u32 1.1754944e-38, %v878
          %v880 = vsel %vm877, %v879, %v875
          %v881 = vrcp.pop %v851
          %v882 = vmul.f32 %v851, %v881
          %v883 = vsub.f32 1.0, %v882
          %v884 = vmul.f32 %v881, %v883
          %v885 = vadd.f32 %v881, %v884
          %vm886 = vweird.f32 %v851
          %vm887 = vweird.f32 %v881
          %vm888 = vmor %vm886, %vm887
          %v889 = vsel %vm888, %v881, %v885
          %v890 = vand.u32 2147483647, %v851
          %vm891 = vcmp.eq.f32.partialorder %v890, 8.507059e+37
          %v892 = vand.u32 %v851, 2147483648
          %v893 = vor.u32 1.1754944e-38, %v892
          %v894 = vsel %vm891, %v893, %v889
          %v895 = vrcp.pop %v852
          %v896 = vmul.f32 %v852, %v895
          %v897 = vsub.f32 1.0, %v896
          %v898 = vmul.f32 %v895, %v897
          %v899 = vadd.f32 %v895, %v898
          %vm900 = vweird.f32 %v852
          %vm901 = vweird.f32 %v895
          %vm902 = vmor %vm900, %vm901
          %v903 = vsel %vm902, %v895, %v899
          %v904 = vand.u32 2147483647, %v852
          %vm905 = vcmp.eq.f32.partialorder %v904, 8.507059e+37
          %v906 = vand.u32 %v852, 2147483648
          %v907 = vor.u32 1.1754944e-38, %v906
          %v908 = vsel %vm905, %v907, %v903
          %v909 = vmul.f32 %v841, %v866
          %v910 = vmul.f32 %v842, %v880
          %v911 = vmul.f32 %v843, %v894
          %v912 = vmul.f32 %v844, %v908
          %v913 = vmul.f32 %v909, %v909
          %v914 = vmul.f32 %v910, %v910
          %v915 = vmul.f32 %v911, %v911
          %v916 = vmul.f32 %v912, %v912
          %v917 = vsub.f32 %v837, %v845
          %v918 = vsub.f32 %v838, %v846
          %v919 = vsub.f32 %v839, %v847
          %v920 = vsub.f32 %v840, %v848
          %v921 = vmul.f32 %v917, %v866
          %v922 = vmul.f32 %v918, %v880
          %v923 = vmul.f32 %v919, %v894
          %v924 = vmul.f32 %v920, %v908
          %v925 = vmul.f32 %v921, %v921
          %v926 = vmul.f32 %v922, %v922
          %v927 = vmul.f32 %v923, %v923
          %v928 = vmul.f32 %v924, %v924
          %v929 = vadd.f32 %v913, %v925
          %v930 = vadd.f32 %v914, %v926
          %v931 = vadd.f32 %v915, %v927
          %v932 = vadd.f32 %v916, %v928
          %v933 = vsub.f32 %v929, 1.0
          %v934 = vsub.f32 %v930, 1.0
          %v935 = vsub.f32 %v931, 1.0
          %v936 = vsub.f32 %v932, 1.0
          %v937 = vlog2.pop %v913
          %v938 = vmul.f32 %v937, 0.6931472
          %v939 = vlog2.pop %v914
          %v940 = vmul.f32 %v939, 0.6931472
          %v941 = vlog2.pop %v915
          %v942 = vmul.f32 %v941, 0.6931472
          %v943 = vlog2.pop %v916
          %v944 = vmul.f32 %v943, 0.6931472
          %v945 = vsub.f32 %v933, %v938
          %v946 = vsub.f32 %v934, %v940
          %v947 = vsub.f32 %v935, %v942
          %v948 = vsub.f32 %v936, %v944
          %v949 = vmul.f32 %v945, 0.5
          %v950 = vmul.f32 %v946, 0.5
          %v951 = vmul.f32 %v947, 0.5
          %v952 = vmul.f32 %v948, 0.5
          %v953 = vsel %vm824, %v949, 0.0
          %v954 = vsel %vm824, %v950, 0.0
          %v955 = vadd.f32 %v953, %v954
          %v956 = vsel %vm824, %v951, 0.0
          %v957 = vadd.f32 %v955, %v956
          %v958 = vsel %vm824, %v952, 0.0
          %v959 = vadd.f32 %v957, %v958
          %960 = vadd.xlane.f32.xlu0 %v959
          %v961 = vpop.xlane.xlu0 %960
          %v962 = vrot.slane %v961, 4
          %v963 = vadd.f32 %v961, %v962
          %v964 = vrot.slane %v963, 2
          %v965 = vadd.f32 %v963, %v964
          %v966 = vrot.slane %v965, 1
          %v967 = vadd.f32 %v965, %v966
          %s968 = vtos %v967
          %v969 = vld [vmem:[#allocation2] sm:$0xff]
          %v970 = vld [vmem:[#allocation2 + $0x8] sm:$0xff]
          %vm971 = vcmask 130048
          %v972 = vsel %vm971, %v969, 0.0
          %v973 = vsel %vm971, %v970, 0.0
          %v974 = vadd.f32 %v972, %v973
          %975 = vadd.xlane.f32.xlu0 %v974
          %v976 = vpop.xlane.xlu0 %975
          %v977 = vrot.slane %v976, 4
          %v978 = vadd.f32 %v976, %v977
          %v979 = vrot.slane %v978, 2
          %v980 = vadd.f32 %v978, %v979
          %v981 = vrot.slane %v980, 1
          %v982 = vadd.f32 %v980, %v981
          %s983 = vtos %v982
          %v984 = vld [vmem:[#allocation3] sm:$0xff]
          %v985 = vld [vmem:[#allocation3 + $0x8] sm:$0xff]
          %vm986 = vcmask 261120
          %v987 = vsel %vm986, %v984, 0.0
          %v988 = vsel %vm986, %v985, 0.0
          %v989 = vadd.f32 %v987, %v988
          %990 = vadd.xlane.f32.xlu0 %v989
          %v991 = vpop.xlane.xlu0 %990
          %v992 = vrot.slane %v991, 4
          %v993 = vadd.f32 %v991, %v992
          %v994 = vrot.slane %v993, 2
          %v995 = vadd.f32 %v993, %v994
          %v996 = vrot.slane %v995, 1
          %v997 = vadd.f32 %v995, %v996
          %s998 = vtos %v997
          %s999 = sadd.f32 %s983, %s998
          %s1000 = sld [smem:[#allocation4 + $0x4]]
          %s1001 = smul.f32 %s1000, %s836
          %s1002 = sld [smem:[#allocation4 + $0x5]]
          %s1003 = smul.f32 %s1002, %s968
          %s1004 = sadd.f32 %s1001, %s1003
          %v1005 = vstv %s999
          %vm1006 = vcmask 0
          %1007 = vst.msk [vmem:[#allocation7] sm:$0x1] %vm1006, %v1005
          %v1008 = vstv %s1004
          %1009 = vst.msk [vmem:[#allocation8] sm:$0x1] %vm1006, %v1008
        $region92: #{vae_loss.1} parent=71 // pred_fallthru
          _
        // Predicated region
        $region93: #{vae_loss.1} parent=71 // pred_check
          %p1010 = pneg %p355
        $region94: #{vae_loss.1} parent=71 // pred_check_branch
          %1012 = sbr.rel (%p1010) target = $region96
        $region95: #{vae_loss.1} parent=71 // pred_region
          %1014 = vsyncadd [#allocation5], 0
          %s1016 = sshll.u32 [#allocation7], 4
          %s1017 = int_to_ptr.vmem [resolvable:$true] %s1016
          %s1018 = sshll.u32 %s13, 4
          %s1019 = int_to_ptr.hbm [resolvable:$true] %s1018
          %1021 = dma.vmem_to_hbm [thread:$0]  %s1017, 16, %s1019, [#allocation5]
        $region96: #{vae_loss.1} parent=71 // pred_fallthru
          _
        // Predicated region
        $region97: #{vae_loss.1} parent=71 // pred_check
          %p1022 = pneg %p376
        $region98: #{vae_loss.1} parent=71 // pred_check_branch
          %1024 = sbr.rel (%p1022) target = $region100
        $region99: #{vae_loss.1} parent=71 // pred_region
          %1026 = vsyncadd [#allocation9], 0
          %s1028 = sshll.u32 [#allocation8], 4
          %s1029 = int_to_ptr.vmem [resolvable:$true] %s1028
          %s1030 = sshll.u32 %s14, 4
          %s1031 = int_to_ptr.hbm [resolvable:$true] %s1030
          %1033 = dma.vmem_to_hbm [thread:$0]  %s1029, 16, %s1031, [#allocation9]
        $region100: #{vae_loss.1} parent=71 // pred_fallthru
          _
        // Predicated region
        $region101: #{vae_loss.1} parent=71 // pred_check
          %p1034 = pneg %p355
        $region102: #{vae_loss.1} parent=71 // pred_check_branch
          %1036 = sbr.rel (%p1034) target = $region104
        $region103: #{vae_loss.1} parent=71 // pred_region
          %1038 = dma.done [#allocation5], 16
        $region104: #{vae_loss.1} parent=71 // pred_fallthru
          _
        // Predicated region
        $region105: #{vae_loss.1} parent=71 // pred_check
          %p1039 = pneg %p376
        $region106: #{vae_loss.1} parent=71 // pred_check_branch
          %1041 = sbr.rel (%p1039) target = $region108
        $region107: #{vae_loss.1} parent=71 // pred_region
          %1043 = dma.done [#allocation9], 16
        $region108: #{vae_loss.1} parent=71 // pred_fallthru
          _
      $region72: #{vae_loss.1} parent=5 // pred_fallthru
        _
      %p1044 = scmp.le.s32.totalorder 2, %s24
      // Predicated region
      $region109: #{vae_loss.1} parent=5 // pred_check
        %p1045 = pneg %p1044
      $region110: #{vae_loss.1} parent=5 // pred_check_branch
        %1047 = sbr.rel (%p1045) target = $region112
      $region111: #{vae_loss.1} parent=5 // pred_region
        %s1048 = ssub.s32 %s24, 2
      $region112: #{vae_loss.1} parent=5 // pred_fallthru
        _
    $region6: #{vae_loss.1} parent=1 // loop_footer
      %s28 = sadd.s32 1, %s24
    $region7: #{vae_loss.1} parent=1 // loop_footer_branch
      %23 = sbr.rel target = $region3
    $region8: #{vae_loss.1} parent=1 // loop_exit
      _
    %1049 = vsyncpa [#allocation5], 1
    %s1050 = scalar_lea.sflag [#allocation5], 1
    %1051 = vsyncpa %s1050, 1
    %1052 = vsyncpa [#allocation9], 1
    %1053 = vsyncpa [#allocation6], 1
    %s1054 = scalar_lea.sflag [#allocation6], 1
    %1055 = vsyncpa %s1054, 1

</llo_original>
